<compile_context>
chip_gen: v6e
topology: v6e:2x2x1
jax: 0.10.0
libtpu: 0.0.40
codegen_flags: <defaults>
</compile_context>

<pallas_src>
import functools

import jax
import jax.numpy as jnp
from jax.experimental import pallas as pl
from jax.experimental.pallas import tpu as pltpu


# ------------------------------ kernel body ---------------------------------

def _bottleneck1x1_kernel(x_ref, w1_ref, w2_ref, w3_ref,
                          b1_ref, b2_ref, b3_ref, o_ref):
    x = x_ref[...]                                                    # (tm, Cp) bf16

    # conv1 (1x1, BN1 scale folded into w1 columns) + bias + ReLU
    h = jnp.dot(x, w1_ref[...], preferred_element_type=jnp.float32)  # (tm, Pp) f32
    h = jnp.maximum(h + b1_ref[...], 0.0)

    # conv2 (1x1, stride=1, BN2 folded) + bias + ReLU
    h = jnp.dot(h.astype(w2_ref.dtype), w2_ref[...],
                preferred_element_type=jnp.float32)                  # (tm, Pp) f32
    h = jnp.maximum(h + b2_ref[...], 0.0)

    # conv3 (1x1, BN3 folded) + bias
    h = jnp.dot(h.astype(w3_ref.dtype), w3_ref[...],
                preferred_element_type=jnp.float32)                  # (tm, Cp) f32
    h = h + b3_ref[...]

    # residual add (downsample=None => residual = x) + final ReLU.
    o_ref[...] = jnp.maximum(h + x.astype(jnp.float32), 0.0).astype(o_ref.dtype)


# ------------------------------ helpers -------------------------------------

def fold_bn(gamma, beta, running_mean, running_var, eps=1e-5):
    scale = gamma / jnp.sqrt(running_var + eps)
    bias = beta - running_mean * scale
    return scale, bias


def _round_up(n, m):
    return (n + m - 1) // m * m


def _pad2d(a, rows, cols):
    return jnp.pad(a, ((0, rows - a.shape[0]), (0, cols - a.shape[1])))


def _vmem_budget_bytes():
    """Per-core VMEM budget (with headroom), derived from the TPU generation."""
    try:
        kind = jax.devices()[0].device_kind.lower()
    except Exception:  # only guards the device-kind query, never the compile
        kind = ""
    if any(g in kind for g in ("v3", "v4", "v5", "v6")):
        return 100 * 1024 * 1024          # 128 MiB physical VMEM per core
    return 48 * 1024 * 1024               # v7x-class: 64 MiB per TC, ~25% headroom


def _working_set_bytes(tm, Cp, Pp, in_isz, out_isz):
    x_tile = 2 * tm * Cp * in_isz                                 # double-buffered in
    o_tile = 2 * tm * Cp * out_isz                                # double-buffered out
    weights = 2 * (Cp * Pp + Pp * Pp + Pp * Cp) * in_isz          # conservatively 2x
    biases = 2 * (2 * Pp + Cp) * 4
    f32_tmp = tm * (Pp + Cp) * 4                                  # in-kernel f32 temps
    return x_tile + o_tile + weights + biases + f32_tmp


def _pick_tm(M, Cp, Pp, in_isz, out_isz, budget):
    """Largest tm fitting the VMEM budget, >=2 grid steps when M allows (v7x TCs)."""
    tm = 8
    for cand in (2048, 1024, 512, 256, 128, 64, 32, 16, 8):
        if _working_set_bytes(cand, Cp, Pp, in_isz, out_isz) <= budget:
            tm = cand
            break
    tm = min(tm, _round_up(M, 8))            # don't over-tile tiny inputs
    while tm > 8 and _round_up(M, tm) // tm < 2 and M > tm // 2:
        tm //= 2                             # guarantee >= 2 grid steps
    return max(8, (tm // 8) * 8)


# --------------------------- core (M, C) path --------------------------------

def _bottleneck1x1_2d(x2d, params, compute_dtype, out_dtype):
    M, C = x2d.shape
    planes = params["w1"].shape[0]
    cout = params["w3"].shape[0]
    assert cout == C, "residual add requires inplanes == planes * expansion"
    odt = compute_dtype if out_dtype is None else out_dtype

    # Fold BN (inference) scale into the conv weight columns; keep the biases.
    s1, b1 = fold_bn(params["g1"], params["be1"], params["m1"], params["v1"])
    s2, b2 = fold_bn(params["g2"], params["be2"], params["m2"], params["v2"])
    s3, b3 = fold_bn(params["g3"], params["be3"], params["m3"], params["v3"])
    w1f = params["w1"].T * s1[None, :]           # (C, planes)
    w2f = params["w2"].T * s2[None, :]           # (planes, planes)
    w3f = params["w3"].T * s3[None, :]           # (planes, cout)

    # Lane-dense padding: channels -> multiple of 128, rows -> multiple of tm.
    Cp = _round_up(max(C, 128), 128)
    Pp = _round_up(max(planes, 128), 128)
    in_isz = jnp.dtype(compute_dtype).itemsize
    out_isz = jnp.dtype(odt).itemsize
    budget = _vmem_budget_bytes()
    tm = _pick_tm(M, Cp, Pp, in_isz, out_isz, budget)
    Mp = _round_up(M, tm)
    grid = (Mp // tm,)

    x_p = _pad2d(x2d, Mp, Cp).astype(compute_dtype)
    w1_p = _pad2d(w1f, Cp, Pp).astype(compute_dtype)
    w2_p = _pad2d(w2f, Pp, Pp).astype(compute_dtype)
    w3_p = _pad2d(w3f, Pp, Cp).astype(compute_dtype)
    b1_p = _pad2d(b1.reshape(1, -1), 1, Pp).astype(jnp.float32)
    b2_p = _pad2d(b2.reshape(1, -1), 1, Pp).astype(jnp.float32)
    b3_p = _pad2d(b3.reshape(1, -1), 1, Cp).astype(jnp.float32)

    # Advisory cost model (weights counted once: constant-index blocks stay resident).
    flops = 2 * Mp * (Cp * Pp + Pp * Pp + Pp * Cp) + 7 * Mp * max(Cp, Pp)
    bytes_accessed = (Mp * Cp * in_isz
                      + (Cp * Pp + Pp * Pp + Pp * Cp) * in_isz
                      + (2 * Pp + Cp) * 4
                      + Mp * Cp * out_isz)
    cost = pl.CostEstimate(flops=int(flops), transcendentals=0,
                           bytes_accessed=int(bytes_accessed))

    ws = _working_set_bytes(tm, Cp, Pp, in_isz, out_isz)
    vmem_limit = int(min(budget, max(2 * ws, 32 * 1024 * 1024)))

    grid_spec = pltpu.PrefetchScalarGridSpec(
        num_scalar_prefetch=0,
        grid=grid,
        in_specs=[
            pl.BlockSpec((tm, Cp), lambda i: (i, 0)),      # x tile (pipelined)
            # Constant index maps -> blocks are kept resident across the grid.
            pl.BlockSpec((Cp, Pp), lambda i: (0, 0)),      # w1 * s1
            pl.BlockSpec((Pp, Pp), lambda i: (0, 0)),      # w2 * s2
            pl.BlockSpec((Pp, Cp), lambda i: (0, 0)),      # w3 * s3
            pl.BlockSpec((1, Pp), lambda i: (0, 0)),       # b1
            pl.BlockSpec((1, Pp), lambda i: (0, 0)),       # b2
            pl.BlockSpec((1, Cp), lambda i: (0, 0)),       # b3
        ],
        out_specs=pl.BlockSpec((tm, Cp), lambda i: (i, 0)),
    )

    out_p = pl.pallas_call(
        _bottleneck1x1_kernel,
        out_shape=jax.ShapeDtypeStruct((Mp, Cp), odt),
        grid_spec=grid_spec,
        compiler_params=pltpu.CompilerParams(
            dimension_semantics=("parallel",),
            vmem_limit_bytes=vmem_limit,
        ),
        cost_estimate=cost,
    )(x_p, w1_p, w2_p, w3_p, b1_p, b2_p, b3_p)

    return out_p[:M, :C]


# ------------------------------ public API -----------------------------------

@functools.partial(jax.jit, static_argnames=("compute_dtype", "out_dtype"))
def bottleneck1x1_2d(x2d, params, compute_dtype=jnp.bfloat16, out_dtype=None):
    """Channels-last (M, C) entry point — preferred when stacking layers."""
    return _bottleneck1x1_2d(x2d, params, compute_dtype, out_dtype)


@functools.partial(jax.jit, static_argnames=("compute_dtype", "out_dtype"))
def bottleneck1x1(x_nchw, params, compute_dtype=jnp.bfloat16, out_dtype=None):
    """PyTorch-compatible NCHW entry point; boundary transposes fuse under jit."""
    # TODO(synk): in a full network keep activations in (M, C)/NHWC bf16 across
    # layers (use bottleneck1x1_2d) to avoid these NCHW HBM round-trips entirely.
    N, C, H, W = x_nchw.shape
    x2d = jnp.transpose(x_nchw, (0, 2, 3, 1)).reshape(N * H * W, C)
    out2d = _bottleneck1x1_2d(x2d, params, compute_dtype, out_dtype)
    return out2d.reshape(N, H, W, C).transpose(0, 3, 1, 2)


# ------------------------------ reference ------------------------------------

def reference(x_nchw, params):
    """Pure-JAX f32 reference of the same forward (1x1 conv == channel matmul)."""
    N, C, H, W = x_nchw.shape
    x2d = jnp.transpose(x_nchw, (0, 2, 3, 1)).reshape(-1, C).astype(jnp.float32)
    s1, b1 = fold_bn(params["g1"], params["be1"], params["m1"], params["v1"])
    s2, b2 = fold_bn(params["g2"], params["be2"], params["m2"], params["v2"])
    s3, b3 = fold_bn(params["g3"], params["be3"], params["m3"], params["v3"])
    h = jnp.maximum(x2d @ params["w1"].T * s1 + b1, 0.0)
    h = jnp.maximum(h @ params["w2"].T * s2 + b2, 0.0)
    h = h @ params["w3"].T * s3 + b3
    o = jnp.maximum(h + x2d, 0.0)
    return o.reshape(N, H, W, C).transpose(0, 3, 1, 2)


# ------------------------------ demo / test ----------------------------------

if __name__ == "__main__":
    # inplanes = planes * expansion so the residual works with downsample=None,
    # exactly as the PyTorch module requires.  Channels are padded to 128 lanes
    # internally.
    planes = 8
    expansion = 4
    inplanes = planes * expansion          # 32
    N, H, W = 2, 16, 16

    key = jax.random.PRNGKey(0)
    kx, k1, k2, k3 = jax.random.split(key, 4)

    x = jax.random.normal(kx, (N, inplanes, H, W), dtype=jnp.float32)

    params = {
        # conv weights (kernel_size=1, bias=False) stored as (out, in)
        "w1": 0.1 * jax.random.normal(k1, (planes, inplanes), jnp.float32),
        "w2": 0.1 * jax.random.normal(k2, (planes, planes), jnp.float32),
        "w3": 0.1 * jax.random.normal(k3, (planes * expansion, planes), jnp.float32),
        # bn1
        "g1": 1.0 + 0.01 * jnp.arange(planes, dtype=jnp.float32),
        "be1": 0.02 * jnp.arange(planes, dtype=jnp.float32),
        "m1": 0.05 * jnp.arange(planes, dtype=jnp.float32),
        "v1": 1.0 + 0.03 * jnp.arange(planes, dtype=jnp.float32),
        # bn2
        "g2": 1.0 - 0.01 * jnp.arange(planes, dtype=jnp.float32),
        "be2": -0.02 * jnp.arange(planes, dtype=jnp.float32),
        "m2": -0.05 * jnp.arange(planes, dtype=jnp.float32),
        "v2": 1.0 + 0.02 * jnp.arange(planes, dtype=jnp.float32),
        # bn3
        "g3": 1.0 + 0.005 * jnp.arange(planes * expansion, dtype=jnp.float32),
        "be3": 0.01 * jnp.arange(planes * expansion, dtype=jnp.float32),
        "m3": 0.02 * jnp.arange(planes * expansion, dtype=jnp.float32),
        "v3": 1.0 + 0.01 * jnp.arange(planes * expansion, dtype=jnp.float32),
    }

    out = bottleneck1x1(x, params)         # default: bf16 output (mem-bound layer)
    out = jax.block_until_ready(out)

    ref = reference(x, params)
    assert out.shape == (N, inplanes, H, W)
    # bf16 MXU inputs + bf16 output (f32 accumulation) vs f32 reference.
    out_f32 = out.astype(jnp.float32)
    max_err = float(jnp.max(jnp.abs(out_f32 - ref)))
    assert jnp.allclose(out_f32, ref, atol=7.5e-2, rtol=7.5e-2), \
        f"mismatch vs reference (max abs err {max_err})"

    print("KERNEL_OK")
</pallas_src>

<mosaic_0001>
module attributes {stable_mosaic.version = 11 : i64} {
  func.func @_bottleneck1x1_kernel(%arg0: i32, %arg1: memref<256x128xbf16, #tpu.memory_space<vmem>>, %arg2: memref<128x128xbf16, #tpu.memory_space<vmem>>, %arg3: memref<128x128xbf16, #tpu.memory_space<vmem>>, %arg4: memref<128x128xbf16, #tpu.memory_space<vmem>>, %arg5: memref<1x128xf32, #tpu.memory_space<vmem>>, %arg6: memref<1x128xf32, #tpu.memory_space<vmem>>, %arg7: memref<1x128xf32, #tpu.memory_space<vmem>>, %arg8: memref<256x128xbf16, #tpu.memory_space<vmem>>) attributes {dimension_semantics = [#tpu.dimension_semantics<parallel>], iteration_bounds = array<i64: 2>, scalar_prefetch = 0 : i64, scratch_operands = 0 : i64, tpu.core_type = #tpu.core_type<tc>, window_params = [{transform_indices = @transform_0, window_bounds = array<i64: 256, 128>}, {pipeline_mode = #tpu.pipeline_mode<synchronous>, transform_indices = @transform_1, window_bounds = array<i64: 128, 128>}, {pipeline_mode = #tpu.pipeline_mode<synchronous>, transform_indices = @transform_2, window_bounds = array<i64: 128, 128>}, {pipeline_mode = #tpu.pipeline_mode<synchronous>, transform_indices = @transform_3, window_bounds = array<i64: 128, 128>}, {pipeline_mode = #tpu.pipeline_mode<synchronous>, transform_indices = @transform_4, window_bounds = array<i64: 1, 128>}, {pipeline_mode = #tpu.pipeline_mode<synchronous>, transform_indices = @transform_5, window_bounds = array<i64: 1, 128>}, {pipeline_mode = #tpu.pipeline_mode<synchronous>, transform_indices = @transform_6, window_bounds = array<i64: 1, 128>}, {transform_indices = @transform_7, window_bounds = array<i64: 256, 128>}]} {
    %c0 = arith.constant 0 : index
    %c0_0 = arith.constant 0 : index
    %0 = vector.load %arg1[%c0, %c0_0] : memref<256x128xbf16, #tpu.memory_space<vmem>>, vector<256x128xbf16>
    %c0_1 = arith.constant 0 : index
    %c0_2 = arith.constant 0 : index
    %1 = vector.load %arg2[%c0_1, %c0_2] : memref<128x128xbf16, #tpu.memory_space<vmem>>, vector<128x128xbf16>
    %cst = arith.constant dense<0.000000e+00> : vector<256x128xf32>
    %2 = tpu.matmul %0, %1, %cst {dimension_numbers = #tpu.dot_dimension_numbers<[1], [0], [0], [1], [0, 0, 1, 1], [], []>} : vector<256x128xbf16>, vector<128x128xbf16>, vector<256x128xf32> -> vector<256x128xf32>
    %c0_3 = arith.constant 0 : index
    %c0_4 = arith.constant 0 : index
    %3 = vector.load %arg5[%c0_3, %c0_4] : memref<1x128xf32, #tpu.memory_space<vmem>>, vector<1x128xf32>
    %4 = vector.broadcast %3 : vector<1x128xf32> to vector<256x128xf32>
    %5 = arith.addf %2, %4 : vector<256x128xf32>
    %cst_5 = arith.constant 0.000000e+00 : f32
    %6 = vector.broadcast %cst_5 : f32 to vector<256x128xf32>
    %7 = arith.maximumf %5, %6 : vector<256x128xf32>
    %8 = arith.truncf %7 : vector<256x128xf32> to vector<256x128xbf16>
    %c0_6 = arith.constant 0 : index
    %c0_7 = arith.constant 0 : index
    %9 = vector.load %arg3[%c0_6, %c0_7] : memref<128x128xbf16, #tpu.memory_space<vmem>>, vector<128x128xbf16>
    %cst_8 = arith.constant dense<0.000000e+00> : vector<256x128xf32>
    %10 = tpu.matmul %8, %9, %cst_8 {dimension_numbers = #tpu.dot_dimension_numbers<[1], [0], [0], [1], [0, 0, 1, 1], [], []>} : vector<256x128xbf16>, vector<128x128xbf16>, vector<256x128xf32> -> vector<256x128xf32>
    %c0_9 = arith.constant 0 : index
    %c0_10 = arith.constant 0 : index
    %11 = vector.load %arg6[%c0_9, %c0_10] : memref<1x128xf32, #tpu.memory_space<vmem>>, vector<1x128xf32>
    %12 = vector.broadcast %11 : vector<1x128xf32> to vector<256x128xf32>
    %13 = arith.addf %10, %12 : vector<256x128xf32>
    %cst_11 = arith.constant 0.000000e+00 : f32
    %14 = vector.broadcast %cst_11 : f32 to vector<256x128xf32>
    %15 = arith.maximumf %13, %14 : vector<256x128xf32>
    %16 = arith.truncf %15 : vector<256x128xf32> to vector<256x128xbf16>
    %c0_12 = arith.constant 0 : index
    %c0_13 = arith.constant 0 : index
    %17 = vector.load %arg4[%c0_12, %c0_13] : memref<128x128xbf16, #tpu.memory_space<vmem>>, vector<128x128xbf16>
    %cst_14 = arith.constant dense<0.000000e+00> : vector<256x128xf32>
    %18 = tpu.matmul %16, %17, %cst_14 {dimension_numbers = #tpu.dot_dimension_numbers<[1], [0], [0], [1], [0, 0, 1, 1], [], []>} : vector<256x128xbf16>, vector<128x128xbf16>, vector<256x128xf32> -> vector<256x128xf32>
    %c0_15 = arith.constant 0 : index
    %c0_16 = arith.constant 0 : index
    %19 = vector.load %arg7[%c0_15, %c0_16] : memref<1x128xf32, #tpu.memory_space<vmem>>, vector<1x128xf32>
    %20 = vector.broadcast %19 : vector<1x128xf32> to vector<256x128xf32>
    %21 = arith.addf %18, %20 : vector<256x128xf32>
    %22 = arith.extf %0 : vector<256x128xbf16> to vector<256x128xf32>
    %23 = arith.addf %21, %22 : vector<256x128xf32>
    %cst_17 = arith.constant 0.000000e+00 : f32
    %24 = vector.broadcast %cst_17 : f32 to vector<256x128xf32>
    %25 = arith.maximumf %23, %24 : vector<256x128xf32>
    %26 = arith.truncf %25 : vector<256x128xf32> to vector<256x128xbf16>
    %c0_18 = arith.constant 0 : index
    %c0_19 = arith.constant 0 : index
    %27 = vector.load %arg8[%c0_18, %c0_19] : memref<256x128xbf16, #tpu.memory_space<vmem>>, vector<256x128xbf16>
    tpu.vector_store %arg8[%c0_18, %c0_19], %26 {strides = array<i32>} : memref<256x128xbf16, #tpu.memory_space<vmem>>, vector<256x128xbf16>,
    return
  }
  func.func @transform_0(%arg0: i32) -> (i32, i32) {
    %c0_i32 = arith.constant 0 : i32
    %c0_i32_0 = arith.constant 0 : i32
    return %arg0, %c0_i32 : i32, i32
  }
  func.func @transform_1(%arg0: i32) -> (i32, i32) {
    %c0_i32 = arith.constant 0 : i32
    %c0_i32_0 = arith.constant 0 : i32
    %c0_i32_1 = arith.constant 0 : i32
    return %c0_i32, %c0_i32_0 : i32, i32
  }
  func.func @transform_2(%arg0: i32) -> (i32, i32) {
    %c0_i32 = arith.constant 0 : i32
    %c0_i32_0 = arith.constant 0 : i32
    %c0_i32_1 = arith.constant 0 : i32
    return %c0_i32, %c0_i32_0 : i32, i32
  }
  func.func @transform_3(%arg0: i32) -> (i32, i32) {
    %c0_i32 = arith.constant 0 : i32
    %c0_i32_0 = arith.constant 0 : i32
    %c0_i32_1 = arith.constant 0 : i32
    return %c0_i32, %c0_i32_0 : i32, i32
  }
  func.func @transform_4(%arg0: i32) -> (i32, i32) {
    %c0_i32 = arith.constant 0 : i32
    %c0_i32_0 = arith.constant 0 : i32
    %c0_i32_1 = arith.constant 0 : i32
    return %c0_i32, %c0_i32_0 : i32, i32
  }
  func.func @transform_5(%arg0: i32) -> (i32, i32) {
    %c0_i32 = arith.constant 0 : i32
    %c0_i32_0 = arith.constant 0 : i32
    %c0_i32_1 = arith.constant 0 : i32
    return %c0_i32, %c0_i32_0 : i32, i32
  }
  func.func @transform_6(%arg0: i32) -> (i32, i32) {
    %c0_i32 = arith.constant 0 : i32
    %c0_i32_0 = arith.constant 0 : i32
    %c0_i32_1 = arith.constant 0 : i32
    return %c0_i32, %c0_i32_0 : i32, i32
  }
  func.func @transform_7(%arg0: i32) -> (i32, i32) {
    %c0_i32 = arith.constant 0 : i32
    %c0_i32_0 = arith.constant 0 : i32
    return %arg0, %c0_i32 : i32, i32
  }
}

</mosaic_0001>

<llo_original>
// kernel: bottleneck1x1.1
$region0: #{bottleneck1x1.1}
  #allocation0 [shape = 'u32[]', space=smem, size = 0x4, offset = 0x4, fixed_abs, tag = 'smem constant byte address 0x4 - core index']
  #allocation1 [shape = 'u32[144,128]{1,0:T(1,128)}', space=vmem, size = 0x12000, scoped, tag = 'internal scratch']
  %s0 = inlined_call_operand.vmem [shape: bf16[512,128], index: 0, kind: input, shape index: {}]
  %s1 = inlined_call_operand.vmem [shape: bf16[128,128], index: 1, kind: input, shape index: {}]
  %s2 = inlined_call_operand.vmem [shape: bf16[128,128], index: 2, kind: input, shape index: {}]
  %s3 = inlined_call_operand.vmem [shape: bf16[128,128], index: 3, kind: input, shape index: {}]
  %s4 = inlined_call_operand.vmem [shape: f32[1,128], index: 4, kind: input, shape index: {}]
  %s5 = inlined_call_operand.vmem [shape: f32[1,128], index: 5, kind: input, shape index: {}]
  %s6 = inlined_call_operand.vmem [shape: f32[1,128], index: 6, kind: input, shape index: {}]
  %s7 = inlined_call_operand.hbm [shape: bf16[512,128], index: 7, kind: output, shape index: {}]
  %s8 = sld [smem:[#allocation0]]
  $region61: #{bottleneck1x1.1} parent=0
    _
  %s10 = ssub.s32 1, %s8
  %s11 = scalar_select 0, %s10, %s8
  $region1: #{bottleneck1x1.1} parent=0
    #allocation2 [shape = 'u8[131072]{0}', space=vmem, size = 0x20000, scoped, tag = 'output window, operand 0']
    #allocation3 [shape = 's32[2]{0}', space=sflag, size = 0x8, scoped, tag = 'scoped memory for bottleneck1x1.1']
    %12 = vsyncpa [#allocation3], 0
    %s13 = scalar_lea.sflag [#allocation3], 1
    %14 = vsyncpa %s13, 0
    loop: start=0, step=1, limit=4
    $region2: #{bottleneck1x1.1} parent=1 // loop_pre_header
      _
    $region3: #{bottleneck1x1.1} parent=1 // loop_header
      %s16 = sphi 0, %s20
      %p17 = scmp.ge.s32.totalorder %s16, 4
      %s26 = sphi 0, %s28
      %s29 = sphi 0, %s26
      %s30 = sphi 0, %s29
      %s46 = sphi 0, %s30
      %s50 = sphi 0, %s50
      %s52 = sphi 0, %s50
      %s53 = sphi 0, %s52
      %s67 = sphi 0, %s53
      %s71 = sphi 0, %s71
      %s73 = sphi 0, %s71
      %s74 = sphi 0, %s73
      %s88 = sphi 0, %s74
      %s92 = sphi 0, %s92
      %s94 = sphi 0, %s92
      %s95 = sphi 0, %s94
      %s109 = sphi 0, %s95
      %s113 = sphi 0, %s113
      %s115 = sphi 0, %s113
      %s116 = sphi 0, %s115
      %s130 = sphi 0, %s116
      %s134 = sphi 0, %s134
      %s136 = sphi 0, %s134
      %s137 = sphi 0, %s136
      %s151 = sphi 0, %s137
      %s155 = sphi 0, %s155
      %s157 = sphi 0, %s155
      %s158 = sphi 0, %s157
      %s172 = sphi 0, %s158
      %s178 = sphi 0, %s180
      %s181 = sphi 0, %s178
      %s182 = sphi 0, %s181
      %s198 = sphi 0, %s182
    $region4: #{bottleneck1x1.1} parent=1 // loop_header_branch
      %19 = sbr.rel (%p17) target = $region8
    $region5: #{bottleneck1x1.1} parent=1 // loop_body
      %s21 = ssub.s32 %s16, 1
      %s22 = ssub.s32 %s16, 2
      %s23 = sadd.s32 %s16, 1
      %s24 = ssub.s32 %s16, %s23
      %p25 = scmp.eq.s32.totalorder %s24, 0
      %s27 = sadd.s32 %s26, 1
      %s28 = scalar_select %p25, %s26, %s27
      %p31 = pneg %p25
      %p32 = scmp.eq.s32.totalorder %s16, 1
      %p33 = por %p31, %p32
      %p34 = scmp.ne.s32.totalorder %s26, %s29
      %p35 = scmp.eq.s32.totalorder %s16, 0
      %p36 = por %p34, %p35
      %p37 = scmp.ne.s32.totalorder %s26, %s29
      %p38 = scmp.eq.s32.totalorder %s21, 1
      %p39 = por %p37, %p38
      %p40 = scmp.ne.s32.totalorder %s29, %s30
      %p41 = scmp.eq.s32.totalorder %s21, 0
      %p42 = por %p40, %p41
      %p43 = scmp.ne.s32.totalorder %s29, %s30
      %p44 = scmp.eq.s32.totalorder %s22, 1
      %p45 = por %p43, %p44
      %p47 = scmp.ne.s32.totalorder %s30, %s46
      %p48 = scmp.eq.s32.totalorder %s22, 0
      %p49 = por %p47, %p48
      %s51 = sadd.s32 %s50, 1
      %p54 = scmp.eq.s32.totalorder %s16, 1
      %p55 = scmp.ne.s32.totalorder %s50, %s52
      %p56 = scmp.eq.s32.totalorder %s16, 0
      %p57 = por %p55, %p56
      %p58 = scmp.ne.s32.totalorder %s50, %s52
      %p59 = scmp.eq.s32.totalorder %s21, 1
      %p60 = por %p58, %p59
      %p61 = scmp.ne.s32.totalorder %s52, %s53
      %p62 = scmp.eq.s32.totalorder %s21, 0
      %p63 = por %p61, %p62
      %p64 = scmp.ne.s32.totalorder %s52, %s53
      %p65 = scmp.eq.s32.totalorder %s22, 1
      %p66 = por %p64, %p65
      %p68 = scmp.ne.s32.totalorder %s53, %s67
      %p69 = scmp.eq.s32.totalorder %s22, 0
      %p70 = por %p68, %p69
      %s72 = sadd.s32 %s71, 1
      %p75 = scmp.eq.s32.totalorder %s16, 1
      %p76 = scmp.ne.s32.totalorder %s71, %s73
      %p77 = scmp.eq.s32.totalorder %s16, 0
      %p78 = por %p76, %p77
      %p79 = scmp.ne.s32.totalorder %s71, %s73
      %p80 = scmp.eq.s32.totalorder %s21, 1
      %p81 = por %p79, %p80
      %p82 = scmp.ne.s32.totalorder %s73, %s74
      %p83 = scmp.eq.s32.totalorder %s21, 0
      %p84 = por %p82, %p83
      %p85 = scmp.ne.s32.totalorder %s73, %s74
      %p86 = scmp.eq.s32.totalorder %s22, 1
      %p87 = por %p85, %p86
      %p89 = scmp.ne.s32.totalorder %s74, %s88
      %p90 = scmp.eq.s32.totalorder %s22, 0
      %p91 = por %p89, %p90
      %s93 = sadd.s32 %s92, 1
      %p96 = scmp.eq.s32.totalorder %s16, 1
      %p97 = scmp.ne.s32.totalorder %s92, %s94
      %p98 = scmp.eq.s32.totalorder %s16, 0
      %p99 = por %p97, %p98
      %p100 = scmp.ne.s32.totalorder %s92, %s94
      %p101 = scmp.eq.s32.totalorder %s21, 1
      %p102 = por %p100, %p101
      %p103 = scmp.ne.s32.totalorder %s94, %s95
      %p104 = scmp.eq.s32.totalorder %s21, 0
      %p105 = por %p103, %p104
      %p106 = scmp.ne.s32.totalorder %s94, %s95
      %p107 = scmp.eq.s32.totalorder %s22, 1
      %p108 = por %p106, %p107
      %p110 = scmp.ne.s32.totalorder %s95, %s109
      %p111 = scmp.eq.s32.totalorder %s22, 0
      %p112 = por %p110, %p111
      %s114 = sadd.s32 %s113, 1
      %p117 = scmp.eq.s32.totalorder %s16, 1
      %p118 = scmp.ne.s32.totalorder %s113, %s115
      %p119 = scmp.eq.s32.totalorder %s16, 0
      %p120 = por %p118, %p119
      %p121 = scmp.ne.s32.totalorder %s113, %s115
      %p122 = scmp.eq.s32.totalorder %s21, 1
      %p123 = por %p121, %p122
      %p124 = scmp.ne.s32.totalorder %s115, %s116
      %p125 = scmp.eq.s32.totalorder %s21, 0
      %p126 = por %p124, %p125
      %p127 = scmp.ne.s32.totalorder %s115, %s116
      %p128 = scmp.eq.s32.totalorder %s22, 1
      %p129 = por %p127, %p128
      %p131 = scmp.ne.s32.totalorder %s116, %s130
      %p132 = scmp.eq.s32.totalorder %s22, 0
      %p133 = por %p131, %p132
      %s135 = sadd.s32 %s134, 1
      %p138 = scmp.eq.s32.totalorder %s16, 1
      %p139 = scmp.ne.s32.totalorder %s134, %s136
      %p140 = scmp.eq.s32.totalorder %s16, 0
      %p141 = por %p139, %p140
      %p142 = scmp.ne.s32.totalorder %s134, %s136
      %p143 = scmp.eq.s32.totalorder %s21, 1
      %p144 = por %p142, %p143
      %p145 = scmp.ne.s32.totalorder %s136, %s137
      %p146 = scmp.eq.s32.totalorder %s21, 0
      %p147 = por %p145, %p146
      %p148 = scmp.ne.s32.totalorder %s136, %s137
      %p149 = scmp.eq.s32.totalorder %s22, 1
      %p150 = por %p148, %p149
      %p152 = scmp.ne.s32.totalorder %s137, %s151
      %p153 = scmp.eq.s32.totalorder %s22, 0
      %p154 = por %p152, %p153
      %s156 = sadd.s32 %s155, 1
      %p159 = scmp.eq.s32.totalorder %s16, 1
      %p160 = scmp.ne.s32.totalorder %s155, %s157
      %p161 = scmp.eq.s32.totalorder %s16, 0
      %p162 = por %p160, %p161
      %p163 = scmp.ne.s32.totalorder %s155, %s157
      %p164 = scmp.eq.s32.totalorder %s21, 1
      %p165 = por %p163, %p164
      %p166 = scmp.ne.s32.totalorder %s157, %s158
      %p167 = scmp.eq.s32.totalorder %s21, 0
      %p168 = por %p166, %p167
      %p169 = scmp.ne.s32.totalorder %s157, %s158
      %p170 = scmp.eq.s32.totalorder %s22, 1
      %p171 = por %p169, %p170
      %p173 = scmp.ne.s32.totalorder %s158, %s172
      %p174 = scmp.eq.s32.totalorder %s22, 0
      %p175 = por %p173, %p174
      %s176 = ssub.s32 %s16, %s23
      %p177 = scmp.eq.s32.totalorder %s176, 0
      %s179 = sadd.s32 %s178, 1
      %s180 = scalar_select %p177, %s178, %s179
      %p183 = pneg %p177
      %p184 = scmp.eq.s32.totalorder %s16, 1
      %p185 = por %p183, %p184
      %p186 = scmp.ne.s32.totalorder %s178, %s181
      %p187 = scmp.eq.s32.totalorder %s16, 0
      %p188 = por %p186, %p187
      %p189 = scmp.ne.s32.totalorder %s178, %s181
      %p190 = scmp.eq.s32.totalorder %s21, 1
      %p191 = por %p189, %p190
      %p192 = scmp.ne.s32.totalorder %s181, %s182
      %p193 = scmp.eq.s32.totalorder %s21, 0
      %p194 = por %p192, %p193
      %p195 = scmp.ne.s32.totalorder %s181, %s182
      %p196 = scmp.eq.s32.totalorder %s22, 1
      %p197 = por %p195, %p196
      %p199 = scmp.ne.s32.totalorder %s182, %s198
      %p200 = scmp.eq.s32.totalorder %s22, 0
      %p201 = por %p199, %p200
      %p202 = scmp.le.s32.totalorder 1, %s16
      %p203 = scmp.lt.s32.totalorder %s16, 3
      %p204 = pnand %p202, %p203
      %p205 = pneg %p204
      // Predicated region
      $region9: #{bottleneck1x1.1} parent=5 // pred_check
        _
      $region10: #{bottleneck1x1.1} parent=5 // pred_check_branch
        %207 = sbr.rel (%p204) target = $region12
      $region11: #{bottleneck1x1.1} parent=5 // pred_region
        %s208 = ssub.s32 %s16, 1
        // Predicated region
        $region13: #{bottleneck1x1.1} parent=11 // pred_check
          %p209 = pneg %p63
        $region14: #{bottleneck1x1.1} parent=11 // pred_check_branch
          %211 = sbr.rel (%p209) target = $region16
        $region15: #{bottleneck1x1.1} parent=11 // pred_region
          _
        $region16: #{bottleneck1x1.1} parent=11 // pred_fallthru
          _
        // Predicated region
        $region17: #{bottleneck1x1.1} parent=11 // pred_check
          %p212 = pneg %p84
        $region18: #{bottleneck1x1.1} parent=11 // pred_check_branch
          %214 = sbr.rel (%p212) target = $region20
        $region19: #{bottleneck1x1.1} parent=11 // pred_region
          _
        $region20: #{bottleneck1x1.1} parent=11 // pred_fallthru
          _
        // Predicated region
        $region21: #{bottleneck1x1.1} parent=11 // pred_check
          %p215 = pneg %p105
        $region22: #{bottleneck1x1.1} parent=11 // pred_check_branch
          %217 = sbr.rel (%p215) target = $region24
        $region23: #{bottleneck1x1.1} parent=11 // pred_region
          _
        $region24: #{bottleneck1x1.1} parent=11 // pred_fallthru
          _
        // Predicated region
        $region25: #{bottleneck1x1.1} parent=11 // pred_check
          %p218 = pneg %p126
        $region26: #{bottleneck1x1.1} parent=11 // pred_check_branch
          %220 = sbr.rel (%p218) target = $region28
        $region27: #{bottleneck1x1.1} parent=11 // pred_region
          _
        $region28: #{bottleneck1x1.1} parent=11 // pred_fallthru
          _
        // Predicated region
        $region29: #{bottleneck1x1.1} parent=11 // pred_check
          %p221 = pneg %p147
        $region30: #{bottleneck1x1.1} parent=11 // pred_check_branch
          %223 = sbr.rel (%p221) target = $region32
        $region31: #{bottleneck1x1.1} parent=11 // pred_region
          _
        $region32: #{bottleneck1x1.1} parent=11 // pred_fallthru
          _
        // Predicated region
        $region33: #{bottleneck1x1.1} parent=11 // pred_check
          %p224 = pneg %p168
        $region34: #{bottleneck1x1.1} parent=11 // pred_check_branch
          %226 = sbr.rel (%p224) target = $region36
        $region35: #{bottleneck1x1.1} parent=11 // pred_region
          _
        $region36: #{bottleneck1x1.1} parent=11 // pred_fallthru
          _
      $region12: #{bottleneck1x1.1} parent=5 // pred_fallthru
        _
      %p227 = scmp.lt.s32.totalorder %s16, 2
      // Predicated region
      $region37: #{bottleneck1x1.1} parent=5 // pred_check
        %p228 = pneg %p227
      $region38: #{bottleneck1x1.1} parent=5 // pred_check_branch
        %230 = sbr.rel (%p228) target = $region40
      $region39: #{bottleneck1x1.1} parent=5 // pred_region
        // Predicated region
        $region41: #{bottleneck1x1.1} parent=39 // pred_check
          %p231 = pneg %p36
        $region42: #{bottleneck1x1.1} parent=39 // pred_check_branch
          %233 = sbr.rel (%p231) target = $region44
        $region43: #{bottleneck1x1.1} parent=39 // pred_region
          %s234 = smul.u32 32, %s16
          %p235 = scmp.lt.s32.totalorder %s234, 63
          %s236 = scalar_select %p235, %s234, 63
          %s237 = smul.addr %s236, 4
          %s238 = scalar_lea.vmem %s0, %s237
          %s239 = smul.u32 32, %s16
        $region44: #{bottleneck1x1.1} parent=39 // pred_fallthru
          _
      $region40: #{bottleneck1x1.1} parent=5 // pred_fallthru
        _
      %p240 = scmp.le.s32.totalorder 1, %s16
      %p241 = scmp.lt.s32.totalorder %s16, 3
      %p242 = pnand %p240, %p241
      %p243 = pneg %p242
      // Predicated region
      $region45: #{bottleneck1x1.1} parent=5 // pred_check
        _
      $region46: #{bottleneck1x1.1} parent=5 // pred_check_branch
        %245 = sbr.rel (%p242) target = $region48
      $region47: #{bottleneck1x1.1} parent=5 // pred_region
        %s246 = ssub.s32 %s16, 1
        %s247 = smul.u32 32, %s21
        %p248 = scmp.lt.s32.totalorder %s247, 63
        %s249 = scalar_select %p248, %s247, 63
        %s250 = smul.addr %s249, 4
        %s251 = scalar_lea.vmem %s0, %s250
        %p252 = pneg %p42
        %p253 = pneg %p39
        %p254 = pneg %p63
        %p255 = pneg %p60
        %p256 = pneg %p84
        %p257 = pneg %p81
        %p258 = pneg %p105
        %p259 = pneg %p102
        %p260 = pneg %p126
        %p261 = pneg %p123
        %p262 = pneg %p147
        %p263 = pneg %p144
        %p264 = pneg %p168
        %p265 = pneg %p165
        %p266 = pneg %p194
        %p267 = pneg %p191
        %s268 = sand.u32 %s181, 1
        %s269 = scalar_lea.sflag [#allocation3], %s268
        %s270 = sand.u32 %s181, 1
        %s271 = smul.addr %s270, 128
        %s272 = scalar_lea.vmem [#allocation2], %s271
        %s273 = smul.u32 32, %s21
        %p274 = scmp.lt.s32.totalorder %s273, 63
        %s275 = scalar_select %p274, %s273, 63
        %s276 = smul.addr %s275, 4
        %s277 = scalar_lea.vmem %s0, %s276
        %s278 = smul.u32 32, %s21
        %s279 = smul.u32 32, %s21
        %v281 = vld [vmem:[%s277] sm:$0xf]
        %v282 = vld [vmem:[%s277 + $0x4] sm:$0xf]
        %v283 = vld [vmem:[%s277 + $0x8] sm:$0xf]
        %v284 = vld [vmem:[%s277 + $0xc] sm:$0xf]
        %v285 = vld [vmem:[%s277 + $0x10] sm:$0xf]
        %v286 = vld [vmem:[%s277 + $0x14] sm:$0xf]
        %v287 = vld [vmem:[%s277 + $0x18] sm:$0xf]
        %v288 = vld [vmem:[%s277 + $0x1c] sm:$0xf]
        %v289 = vld [vmem:[%s277 + $0x20] sm:$0xf]
        %v290 = vld [vmem:[%s277 + $0x24] sm:$0xf]
        %v291 = vld [vmem:[%s277 + $0x28] sm:$0xf]
        %v292 = vld [vmem:[%s277 + $0x2c] sm:$0xf]
        %v293 = vld [vmem:[%s277 + $0x30] sm:$0xf]
        %v294 = vld [vmem:[%s277 + $0x34] sm:$0xf]
        %v295 = vld [vmem:[%s277 + $0x38] sm:$0xf]
        %v296 = vld [vmem:[%s277 + $0x3c] sm:$0xf]
        %v297 = vld [vmem:[%s277 + $0x40] sm:$0xf]
        %v298 = vld [vmem:[%s277 + $0x44] sm:$0xf]
        %v299 = vld [vmem:[%s277 + $0x48] sm:$0xf]
        %v300 = vld [vmem:[%s277 + $0x4c] sm:$0xf]
        %v301 = vld [vmem:[%s277 + $0x50] sm:$0xf]
        %v302 = vld [vmem:[%s277 + $0x54] sm:$0xf]
        %v303 = vld [vmem:[%s277 + $0x58] sm:$0xf]
        %v304 = vld [vmem:[%s277 + $0x5c] sm:$0xf]
        %v305 = vld [vmem:[%s277 + $0x60] sm:$0xf]
        %v306 = vld [vmem:[%s277 + $0x64] sm:$0xf]
        %v307 = vld [vmem:[%s277 + $0x68] sm:$0xf]
        %v308 = vld [vmem:[%s277 + $0x6c] sm:$0xf]
        %v309 = vld [vmem:[%s277 + $0x70] sm:$0xf]
        %v310 = vld [vmem:[%s277 + $0x74] sm:$0xf]
        %v311 = vld [vmem:[%s277 + $0x78] sm:$0xf]
        %v312 = vld [vmem:[%s277 + $0x7c] sm:$0xf]
        %v313 = vld [vmem:[%s1] sm:$0xf]
        %v314 = vld [vmem:[%s1 + $0x4] sm:$0xf]
        %v315 = vld [vmem:[%s1 + $0x8] sm:$0xf]
        %v316 = vld [vmem:[%s1 + $0xc] sm:$0xf]
        %v317 = vld [vmem:[%s1 + $0x10] sm:$0xf]
        %v318 = vld [vmem:[%s1 + $0x14] sm:$0xf]
        %v319 = vld [vmem:[%s1 + $0x18] sm:$0xf]
        %v320 = vld [vmem:[%s1 + $0x1c] sm:$0xf]
        %v321 = vld [vmem:[%s1 + $0x20] sm:$0xf]
        %v322 = vld [vmem:[%s1 + $0x24] sm:$0xf]
        %v323 = vld [vmem:[%s1 + $0x28] sm:$0xf]
        %v324 = vld [vmem:[%s1 + $0x2c] sm:$0xf]
        %v325 = vld [vmem:[%s1 + $0x30] sm:$0xf]
        %v326 = vld [vmem:[%s1 + $0x34] sm:$0xf]
        %v327 = vld [vmem:[%s1 + $0x38] sm:$0xf]
        %v328 = vld [vmem:[%s1 + $0x3c] sm:$0xf]
        %v329 = vld [vmem:[%s4] sm:$0x1]
        %v331 = vlaneseq
        %v332 = vshrl.u32 %v331, 7
        %v333 = vsub.s32 0, %v332
        %v334 = vrot.slane %v329, %v333
        %v368 = vunpack.c.l.b16 %v281
        %v369 = vunpack.c.l.b16 %v282
        %v370 = vunpack.c.l.b16 %v283
        %v371 = vunpack.c.l.b16 %v284
        %v372 = vunpack.c.l.b16 %v285
        %v373 = vunpack.c.l.b16 %v286
        %v374 = vunpack.c.l.b16 %v287
        %v375 = vunpack.c.l.b16 %v288
        %v376 = vunpack.c.l.b16 %v289
        %v377 = vunpack.c.l.b16 %v290
        %v378 = vunpack.c.l.b16 %v291
        %v379 = vunpack.c.l.b16 %v292
        %v380 = vunpack.c.l.b16 %v293
        %v381 = vunpack.c.l.b16 %v294
        %v382 = vunpack.c.l.b16 %v295
        %v383 = vunpack.c.l.b16 %v296
        %v384 = vunpack.c.l.b16 %v297
        %v385 = vunpack.c.l.b16 %v298
        %v386 = vunpack.c.l.b16 %v299
        %v387 = vunpack.c.l.b16 %v300
        %v388 = vunpack.c.l.b16 %v301
        %v389 = vunpack.c.l.b16 %v302
        %v390 = vunpack.c.l.b16 %v303
        %v391 = vunpack.c.l.b16 %v304
        %v392 = vunpack.c.l.b16 %v305
        %v393 = vunpack.c.l.b16 %v306
        %v394 = vunpack.c.l.b16 %v307
        %v395 = vunpack.c.l.b16 %v308
        %v396 = vunpack.c.l.b16 %v309
        %v397 = vunpack.c.l.b16 %v310
        %v398 = vunpack.c.l.b16 %v311
        %v399 = vunpack.c.l.b16 %v312
        %v400 = vpack.c.b16 %v369, %v368
        %v401 = vpack.c.b16 %v371, %v370
        %v402 = vpack.c.b16 %v373, %v372
        %v403 = vpack.c.b16 %v375, %v374
        %v404 = vpack.c.b16 %v377, %v376
        %v405 = vpack.c.b16 %v379, %v378
        %v406 = vpack.c.b16 %v381, %v380
        %v407 = vpack.c.b16 %v383, %v382
        %v408 = vpack.c.b16 %v385, %v384
        %v409 = vpack.c.b16 %v387, %v386
        %v410 = vpack.c.b16 %v389, %v388
        %v411 = vpack.c.b16 %v391, %v390
        %v412 = vpack.c.b16 %v393, %v392
        %v413 = vpack.c.b16 %v395, %v394
        %v414 = vpack.c.b16 %v397, %v396
        %v415 = vpack.c.b16 %v399, %v398
        %v448 = vunpack.c.l.b16 %v313
        %v449 = vunpack.c.l.b16 %v314
        %v450 = vunpack.c.l.b16 %v315
        %v451 = vunpack.c.l.b16 %v316
        %v452 = vunpack.c.l.b16 %v317
        %v453 = vunpack.c.l.b16 %v318
        %v454 = vunpack.c.l.b16 %v319
        %v455 = vunpack.c.l.b16 %v320
        %v456 = vunpack.c.l.b16 %v321
        %v457 = vunpack.c.l.b16 %v322
        %v458 = vunpack.c.l.b16 %v323
        %v459 = vunpack.c.l.b16 %v324
        %v460 = vunpack.c.l.b16 %v325
        %v461 = vunpack.c.l.b16 %v326
        %v462 = vunpack.c.l.b16 %v327
        %v463 = vunpack.c.l.b16 %v328
        %v464 = vpack.c.b16 %v449, %v448
        %v465 = vpack.c.b16 %v451, %v450
        %v466 = vpack.c.b16 %v453, %v452
        %v467 = vpack.c.b16 %v455, %v454
        %v468 = vpack.c.b16 %v457, %v456
        %v469 = vpack.c.b16 %v459, %v458
        %v470 = vpack.c.b16 %v461, %v460
        %v471 = vpack.c.b16 %v463, %v462
        %480 = vmatprep.subr.bf16.mxu0 0
        %481 = vmatpush1.bf16.msra.mxu0 %v471
        %482 = vmatprep.subr.bf16.mxu0 0
        %483 = vmatpush1.bf16.msra.mxu0 %v470
        %484 = vmatprep.subr.bf16.mxu0 0
        %485 = vmatpush1.bf16.msra.mxu0 %v469
        %486 = vmatprep.subr.bf16.mxu0 0
        %487 = vmatpush1.bf16.msra.mxu0 %v468
        %488 = vmatprep.subr.bf16.mxu0 0
        %489 = vmatpush1.bf16.msra.mxu0 %v467
        %490 = vmatprep.subr.bf16.mxu0 0
        %491 = vmatpush1.bf16.msra.mxu0 %v466
        %492 = vmatprep.subr.bf16.mxu0 0
        %493 = vmatpush1.bf16.msra.mxu0 %v465
        %494 = vmatprep.subr.bf16.mxu0 0
        %495 = vmatpush1.bf16.msra.mxu0 %v464
        %496 = vmatprep.subr.bf16.mxu0 0
        %497 = vmatpush2.bf16.msra.mxu0 0
        %498 = vmatprep.subr.bf16.mxu0 0
        %499 = vmatpush2.bf16.msra.mxu0 0
        %500 = vmatprep.subr.bf16.mxu0 0
        %501 = vmatpush2.bf16.msra.mxu0 0
        %502 = vmatprep.subr.bf16.mxu0 0
        %503 = vmatpush2.bf16.msra.mxu0 0
        %504 = vmatprep.subr.bf16.mxu0 0
        %505 = vmatpush2.bf16.msra.mxu0 0
        %506 = vmatprep.subr.bf16.mxu0 0
        %507 = vmatpush2.bf16.msra.mxu0 0
        %508 = vmatprep.subr.bf16.mxu0 0
        %509 = vmatpush2.bf16.msra.mxu0 0
        %510 = vmatprep.subr.bf16.mxu0 0
        %511 = vmatpush2.bf16.msra.mxu0 0
        %512 = vmatprep.mubr.bf16.mxu0 0
        %513 = vmatmul.mubr.bf16.gmra.mxu0 %v400
        %v514 = vpop.f32.mrf.mxu0
        %v515 = vadd.f32 %v334, %v514
        %v516 = vpop.f32.mrf.mxu0
        %v517 = vpop.f32.mrf.mxu0
        %v518 = vadd.f32 %v334, %v517
        %v519 = vpop.f32.mrf.mxu0
        %520 = vmatprep.mubr.bf16.mxu0 0
        %521 = vmatmul.mubr.bf16.gmra.mxu0 %v401
        %v522 = vpop.f32.mrf.mxu0
        %v523 = vadd.f32 %v334, %v522
        %v524 = vpop.f32.mrf.mxu0
        %v525 = vpop.f32.mrf.mxu0
        %v526 = vadd.f32 %v334, %v525
        %v527 = vpop.f32.mrf.mxu0
        %528 = vmatprep.mubr.bf16.mxu0 0
        %529 = vmatmul.mubr.bf16.gmra.mxu0 %v402
        %v530 = vpop.f32.mrf.mxu0
        %v531 = vadd.f32 %v334, %v530
        %v532 = vpop.f32.mrf.mxu0
        %v533 = vpop.f32.mrf.mxu0
        %v534 = vadd.f32 %v334, %v533
        %v535 = vpop.f32.mrf.mxu0
        %536 = vmatprep.mubr.bf16.mxu0 0
        %537 = vmatmul.mubr.bf16.gmra.mxu0 %v403
        %v538 = vpop.f32.mrf.mxu0
        %v539 = vadd.f32 %v334, %v538
        %v540 = vpop.f32.mrf.mxu0
        %v541 = vpop.f32.mrf.mxu0
        %v542 = vadd.f32 %v334, %v541
        %v543 = vpop.f32.mrf.mxu0
        %544 = vmatprep.mubr.bf16.mxu0 0
        %545 = vmatmul.mubr.bf16.gmra.mxu0 %v404
        %v546 = vpop.f32.mrf.mxu0
        %v547 = vadd.f32 %v334, %v546
        %v548 = vpop.f32.mrf.mxu0
        %v549 = vpop.f32.mrf.mxu0
        %v550 = vadd.f32 %v334, %v549
        %v551 = vpop.f32.mrf.mxu0
        %552 = vmatprep.mubr.bf16.mxu0 0
        %553 = vmatmul.mubr.bf16.gmra.mxu0 %v405
        %v554 = vpop.f32.mrf.mxu0
        %v555 = vadd.f32 %v334, %v554
        %v556 = vpop.f32.mrf.mxu0
        %v557 = vpop.f32.mrf.mxu0
        %v558 = vadd.f32 %v334, %v557
        %v559 = vpop.f32.mrf.mxu0
        %560 = vmatprep.mubr.bf16.mxu0 0
        %561 = vmatmul.mubr.bf16.gmra.mxu0 %v406
        %v562 = vpop.f32.mrf.mxu0
        %v563 = vadd.f32 %v334, %v562
        %v564 = vpop.f32.mrf.mxu0
        %v565 = vpop.f32.mrf.mxu0
        %v566 = vadd.f32 %v334, %v565
        %v567 = vpop.f32.mrf.mxu0
        %568 = vmatprep.mubr.bf16.mxu0 0
        %569 = vmatmul.mubr.bf16.gmra.mxu0 %v407
        %v570 = vpop.f32.mrf.mxu0
        %v571 = vadd.f32 %v334, %v570
        %v572 = vpop.f32.mrf.mxu0
        %v573 = vpop.f32.mrf.mxu0
        %v574 = vadd.f32 %v334, %v573
        %v575 = vpop.f32.mrf.mxu0
        %576 = vmatprep.mubr.bf16.mxu0 0
        %577 = vmatmul.mubr.bf16.gmra.mxu0 %v408
        %v578 = vpop.f32.mrf.mxu0
        %v579 = vadd.f32 %v334, %v578
        %v580 = vpop.f32.mrf.mxu0
        %v581 = vpop.f32.mrf.mxu0
        %v582 = vadd.f32 %v334, %v581
        %v583 = vpop.f32.mrf.mxu0
        %584 = vmatprep.mubr.bf16.mxu0 0
        %585 = vmatmul.mubr.bf16.gmra.mxu0 %v409
        %v586 = vpop.f32.mrf.mxu0
        %v587 = vadd.f32 %v334, %v586
        %v588 = vpop.f32.mrf.mxu0
        %v589 = vpop.f32.mrf.mxu0
        %v590 = vadd.f32 %v334, %v589
        %v591 = vpop.f32.mrf.mxu0
        %592 = vmatprep.mubr.bf16.mxu0 0
        %593 = vmatmul.mubr.bf16.gmra.mxu0 %v410
        %v594 = vpop.f32.mrf.mxu0
        %v595 = vadd.f32 %v334, %v594
        %v596 = vpop.f32.mrf.mxu0
        %v597 = vpop.f32.mrf.mxu0
        %v598 = vadd.f32 %v334, %v597
        %v599 = vpop.f32.mrf.mxu0
        %600 = vmatprep.mubr.bf16.mxu0 0
        %601 = vmatmul.mubr.bf16.gmra.mxu0 %v411
        %v602 = vpop.f32.mrf.mxu0
        %v603 = vadd.f32 %v334, %v602
        %v604 = vpop.f32.mrf.mxu0
        %v605 = vpop.f32.mrf.mxu0
        %v606 = vadd.f32 %v334, %v605
        %v607 = vpop.f32.mrf.mxu0
        %608 = vmatprep.mubr.bf16.mxu0 0
        %609 = vmatmul.mubr.bf16.gmra.mxu0 %v412
        %v610 = vpop.f32.mrf.mxu0
        %v611 = vadd.f32 %v334, %v610
        %v612 = vpop.f32.mrf.mxu0
        %v613 = vpop.f32.mrf.mxu0
        %v614 = vadd.f32 %v334, %v613
        %v615 = vpop.f32.mrf.mxu0
        %616 = vmatprep.mubr.bf16.mxu0 0
        %617 = vmatmul.mubr.bf16.gmra.mxu0 %v413
        %v618 = vpop.f32.mrf.mxu0
        %v619 = vadd.f32 %v334, %v618
        %v620 = vpop.f32.mrf.mxu0
        %v621 = vpop.f32.mrf.mxu0
        %v622 = vadd.f32 %v334, %v621
        %v623 = vpop.f32.mrf.mxu0
        %624 = vmatprep.mubr.bf16.mxu0 0
        %625 = vmatmul.mubr.bf16.gmra.mxu0 %v414
        %v626 = vpop.f32.mrf.mxu0
        %v627 = vadd.f32 %v334, %v626
        %v628 = vpop.f32.mrf.mxu0
        %v629 = vpop.f32.mrf.mxu0
        %v630 = vadd.f32 %v334, %v629
        %v631 = vpop.f32.mrf.mxu0
        %632 = vmatprep.mubr.bf16.mxu0 0
        %633 = vmatmul.mubr.bf16.gmra.mxu0 %v415
        %v634 = vpop.f32.mrf.mxu0
        %v635 = vadd.f32 %v334, %v634
        %v636 = vpop.f32.mrf.mxu0
        %v637 = vpop.f32.mrf.mxu0
        %v638 = vadd.f32 %v334, %v637
        %v639 = vpop.f32.mrf.mxu0
        %640 = vdwg.mxu0
        %v641 = vmax.f32 %v515, 0.0
        %v642 = vmax.f32 %v518, 0.0
        %v643 = vmax.f32 %v523, 0.0
        %v644 = vmax.f32 %v526, 0.0
        %v645 = vmax.f32 %v531, 0.0
        %v646 = vmax.f32 %v534, 0.0
        %v647 = vmax.f32 %v539, 0.0
        %v648 = vmax.f32 %v542, 0.0
        %v649 = vmax.f32 %v547, 0.0
        %v650 = vmax.f32 %v550, 0.0
        %v651 = vmax.f32 %v555, 0.0
        %v652 = vmax.f32 %v558, 0.0
        %v653 = vmax.f32 %v563, 0.0
        %v654 = vmax.f32 %v566, 0.0
        %v655 = vmax.f32 %v571, 0.0
        %v656 = vmax.f32 %v574, 0.0
        %v657 = vmax.f32 %v579, 0.0
        %v658 = vmax.f32 %v582, 0.0
        %v659 = vmax.f32 %v587, 0.0
        %v660 = vmax.f32 %v590, 0.0
        %v661 = vmax.f32 %v595, 0.0
        %v662 = vmax.f32 %v598, 0.0
        %v663 = vmax.f32 %v603, 0.0
        %v664 = vmax.f32 %v606, 0.0
        %v665 = vmax.f32 %v611, 0.0
        %v666 = vmax.f32 %v614, 0.0
        %v667 = vmax.f32 %v619, 0.0
        %v668 = vmax.f32 %v622, 0.0
        %v669 = vmax.f32 %v627, 0.0
        %v670 = vmax.f32 %v630, 0.0
        %v671 = vmax.f32 %v635, 0.0
        %v672 = vmax.f32 %v638, 0.0
        %v673 = vpack.c.bf16 %v642, %v641
        %v674 = vpack.c.bf16 %v644, %v643
        %v675 = vpack.c.bf16 %v646, %v645
        %v676 = vpack.c.bf16 %v648, %v647
        %v677 = vpack.c.bf16 %v650, %v649
        %v678 = vpack.c.bf16 %v652, %v651
        %v679 = vpack.c.bf16 %v654, %v653
        %v680 = vpack.c.bf16 %v656, %v655
        %v681 = vpack.c.bf16 %v658, %v657
        %v682 = vpack.c.bf16 %v660, %v659
        %v683 = vpack.c.bf16 %v662, %v661
        %v684 = vpack.c.bf16 %v664, %v663
        %v685 = vpack.c.bf16 %v666, %v665
        %v686 = vpack.c.bf16 %v668, %v667
        %v687 = vpack.c.bf16 %v670, %v669
        %v688 = vpack.c.bf16 %v672, %v671
        %v689 = vld [vmem:[%s2] sm:$0xf]
        %v690 = vld [vmem:[%s2 + $0x4] sm:$0xf]
        %v691 = vld [vmem:[%s2 + $0x8] sm:$0xf]
        %v692 = vld [vmem:[%s2 + $0xc] sm:$0xf]
        %v693 = vld [vmem:[%s2 + $0x10] sm:$0xf]
        %v694 = vld [vmem:[%s2 + $0x14] sm:$0xf]
        %v695 = vld [vmem:[%s2 + $0x18] sm:$0xf]
        %v696 = vld [vmem:[%s2 + $0x1c] sm:$0xf]
        %v697 = vld [vmem:[%s2 + $0x20] sm:$0xf]
        %v698 = vld [vmem:[%s2 + $0x24] sm:$0xf]
        %v699 = vld [vmem:[%s2 + $0x28] sm:$0xf]
        %v700 = vld [vmem:[%s2 + $0x2c] sm:$0xf]
        %v701 = vld [vmem:[%s2 + $0x30] sm:$0xf]
        %v702 = vld [vmem:[%s2 + $0x34] sm:$0xf]
        %v703 = vld [vmem:[%s2 + $0x38] sm:$0xf]
        %v704 = vld [vmem:[%s2 + $0x3c] sm:$0xf]
        %v705 = vld [vmem:[%s5] sm:$0x1]
        %v707 = vlaneseq
        %v708 = vshrl.u32 %v707, 7
        %v709 = vsub.s32 0, %v708
        %v710 = vrot.slane %v705, %v709
        %v728 = vunpack.c.l.b16 %v689
        %v729 = vunpack.c.l.b16 %v690
        %v730 = vunpack.c.l.b16 %v691
        %v731 = vunpack.c.l.b16 %v692
        %v732 = vunpack.c.l.b16 %v693
        %v733 = vunpack.c.l.b16 %v694
        %v734 = vunpack.c.l.b16 %v695
        %v735 = vunpack.c.l.b16 %v696
        %v736 = vunpack.c.l.b16 %v697
        %v737 = vunpack.c.l.b16 %v698
        %v738 = vunpack.c.l.b16 %v699
        %v739 = vunpack.c.l.b16 %v700
        %v740 = vunpack.c.l.b16 %v701
        %v741 = vunpack.c.l.b16 %v702
        %v742 = vunpack.c.l.b16 %v703
        %v743 = vunpack.c.l.b16 %v704
        %v744 = vpack.c.b16 %v729, %v728
        %v745 = vpack.c.b16 %v731, %v730
        %v746 = vpack.c.b16 %v733, %v732
        %v747 = vpack.c.b16 %v735, %v734
        %v748 = vpack.c.b16 %v737, %v736
        %v749 = vpack.c.b16 %v739, %v738
        %v750 = vpack.c.b16 %v741, %v740
        %v751 = vpack.c.b16 %v743, %v742
        %760 = vmatprep.subr.bf16.mxu0 0
        %761 = vmatpush1.bf16.msra.mxu0 %v751
        %762 = vmatprep.subr.bf16.mxu0 0
        %763 = vmatpush1.bf16.msra.mxu0 %v750
        %764 = vmatprep.subr.bf16.mxu0 0
        %765 = vmatpush1.bf16.msra.mxu0 %v749
        %766 = vmatprep.subr.bf16.mxu0 0
        %767 = vmatpush1.bf16.msra.mxu0 %v748
        %768 = vmatprep.subr.bf16.mxu0 0
        %769 = vmatpush1.bf16.msra.mxu0 %v747
        %770 = vmatprep.subr.bf16.mxu0 0
        %771 = vmatpush1.bf16.msra.mxu0 %v746
        %772 = vmatprep.subr.bf16.mxu0 0
        %773 = vmatpush1.bf16.msra.mxu0 %v745
        %774 = vmatprep.subr.bf16.mxu0 0
        %775 = vmatpush1.bf16.msra.mxu0 %v744
        %776 = vmatprep.subr.bf16.mxu0 0
        %777 = vmatpush2.bf16.msra.mxu0 0
        %778 = vmatprep.subr.bf16.mxu0 0
        %779 = vmatpush2.bf16.msra.mxu0 0
        %780 = vmatprep.subr.bf16.mxu0 0
        %781 = vmatpush2.bf16.msra.mxu0 0
        %782 = vmatprep.subr.bf16.mxu0 0
        %783 = vmatpush2.bf16.msra.mxu0 0
        %784 = vmatprep.subr.bf16.mxu0 0
        %785 = vmatpush2.bf16.msra.mxu0 0
        %786 = vmatprep.subr.bf16.mxu0 0
        %787 = vmatpush2.bf16.msra.mxu0 0
        %788 = vmatprep.subr.bf16.mxu0 0
        %789 = vmatpush2.bf16.msra.mxu0 0
        %790 = vmatprep.subr.bf16.mxu0 0
        %791 = vmatpush2.bf16.msra.mxu0 0
        %792 = vmatprep.mubr.bf16.mxu0 0
        %793 = vmatmul.mubr.bf16.gmra.mxu0 %v673
        %v794 = vpop.f32.mrf.mxu0
        %v795 = vadd.f32 %v710, %v794
        %v796 = vpop.f32.mrf.mxu0
        %v797 = vpop.f32.mrf.mxu0
        %v798 = vadd.f32 %v710, %v797
        %v799 = vpop.f32.mrf.mxu0
        %800 = vmatprep.mubr.bf16.mxu0 0
        %801 = vmatmul.mubr.bf16.gmra.mxu0 %v674
        %v802 = vpop.f32.mrf.mxu0
        %v803 = vadd.f32 %v710, %v802
        %v804 = vpop.f32.mrf.mxu0
        %v805 = vpop.f32.mrf.mxu0
        %v806 = vadd.f32 %v710, %v805
        %v807 = vpop.f32.mrf.mxu0
        %808 = vmatprep.mubr.bf16.mxu0 0
        %809 = vmatmul.mubr.bf16.gmra.mxu0 %v675
        %v810 = vpop.f32.mrf.mxu0
        %v811 = vadd.f32 %v710, %v810
        %v812 = vpop.f32.mrf.mxu0
        %v813 = vpop.f32.mrf.mxu0
        %v814 = vadd.f32 %v710, %v813
        %v815 = vpop.f32.mrf.mxu0
        %816 = vmatprep.mubr.bf16.mxu0 0
        %817 = vmatmul.mubr.bf16.gmra.mxu0 %v676
        %v818 = vpop.f32.mrf.mxu0
        %v819 = vadd.f32 %v710, %v818
        %v820 = vpop.f32.mrf.mxu0
        %v821 = vpop.f32.mrf.mxu0
        %v822 = vadd.f32 %v710, %v821
        %v823 = vpop.f32.mrf.mxu0
        %824 = vmatprep.mubr.bf16.mxu0 0
        %825 = vmatmul.mubr.bf16.gmra.mxu0 %v677
        %v826 = vpop.f32.mrf.mxu0
        %v827 = vadd.f32 %v710, %v826
        %v828 = vpop.f32.mrf.mxu0
        %v829 = vpop.f32.mrf.mxu0
        %v830 = vadd.f32 %v710, %v829
        %v831 = vpop.f32.mrf.mxu0
        %832 = vmatprep.mubr.bf16.mxu0 0
        %833 = vmatmul.mubr.bf16.gmra.mxu0 %v678
        %v834 = vpop.f32.mrf.mxu0
        %v835 = vadd.f32 %v710, %v834
        %v836 = vpop.f32.mrf.mxu0
        %v837 = vpop.f32.mrf.mxu0
        %v838 = vadd.f32 %v710, %v837
        %v839 = vpop.f32.mrf.mxu0
        %840 = vmatprep.mubr.bf16.mxu0 0
        %841 = vmatmul.mubr.bf16.gmra.mxu0 %v679
        %v842 = vpop.f32.mrf.mxu0
        %v843 = vadd.f32 %v710, %v842
        %v844 = vpop.f32.mrf.mxu0
        %v845 = vpop.f32.mrf.mxu0
        %v846 = vadd.f32 %v710, %v845
        %v847 = vpop.f32.mrf.mxu0
        %848 = vmatprep.mubr.bf16.mxu0 0
        %849 = vmatmul.mubr.bf16.gmra.mxu0 %v680
        %v850 = vpop.f32.mrf.mxu0
        %v851 = vadd.f32 %v710, %v850
        %v852 = vpop.f32.mrf.mxu0
        %v853 = vpop.f32.mrf.mxu0
        %v854 = vadd.f32 %v710, %v853
        %v855 = vpop.f32.mrf.mxu0
        %856 = vmatprep.mubr.bf16.mxu0 0
        %857 = vmatmul.mubr.bf16.gmra.mxu0 %v681
        %v858 = vpop.f32.mrf.mxu0
        %v859 = vadd.f32 %v710, %v858
        %v860 = vpop.f32.mrf.mxu0
        %v861 = vpop.f32.mrf.mxu0
        %v862 = vadd.f32 %v710, %v861
        %v863 = vpop.f32.mrf.mxu0
        %864 = vmatprep.mubr.bf16.mxu0 0
        %865 = vmatmul.mubr.bf16.gmra.mxu0 %v682
        %v866 = vpop.f32.mrf.mxu0
        %v867 = vadd.f32 %v710, %v866
        %v868 = vpop.f32.mrf.mxu0
        %v869 = vpop.f32.mrf.mxu0
        %v870 = vadd.f32 %v710, %v869
        %v871 = vpop.f32.mrf.mxu0
        %872 = vmatprep.mubr.bf16.mxu0 0
        %873 = vmatmul.mubr.bf16.gmra.mxu0 %v683
        %v874 = vpop.f32.mrf.mxu0
        %v875 = vadd.f32 %v710, %v874
        %v876 = vpop.f32.mrf.mxu0
        %v877 = vpop.f32.mrf.mxu0
        %v878 = vadd.f32 %v710, %v877
        %v879 = vpop.f32.mrf.mxu0
        %880 = vmatprep.mubr.bf16.mxu0 0
        %881 = vmatmul.mubr.bf16.gmra.mxu0 %v684
        %v882 = vpop.f32.mrf.mxu0
        %v883 = vadd.f32 %v710, %v882
        %v884 = vpop.f32.mrf.mxu0
        %v885 = vpop.f32.mrf.mxu0
        %v886 = vadd.f32 %v710, %v885
        %v887 = vpop.f32.mrf.mxu0
        %888 = vmatprep.mubr.bf16.mxu0 0
        %889 = vmatmul.mubr.bf16.gmra.mxu0 %v685
        %v890 = vpop.f32.mrf.mxu0
        %v891 = vadd.f32 %v710, %v890
        %v892 = vpop.f32.mrf.mxu0
        %v893 = vpop.f32.mrf.mxu0
        %v894 = vadd.f32 %v710, %v893
        %v895 = vpop.f32.mrf.mxu0
        %896 = vmatprep.mubr.bf16.mxu0 0
        %897 = vmatmul.mubr.bf16.gmra.mxu0 %v686
        %v898 = vpop.f32.mrf.mxu0
        %v899 = vadd.f32 %v710, %v898
        %v900 = vpop.f32.mrf.mxu0
        %v901 = vpop.f32.mrf.mxu0
        %v902 = vadd.f32 %v710, %v901
        %v903 = vpop.f32.mrf.mxu0
        %904 = vmatprep.mubr.bf16.mxu0 0
        %905 = vmatmul.mubr.bf16.gmra.mxu0 %v687
        %v906 = vpop.f32.mrf.mxu0
        %v907 = vadd.f32 %v710, %v906
        %v908 = vpop.f32.mrf.mxu0
        %v909 = vpop.f32.mrf.mxu0
        %v910 = vadd.f32 %v710, %v909
        %v911 = vpop.f32.mrf.mxu0
        %912 = vmatprep.mubr.bf16.mxu0 0
        %913 = vmatmul.mubr.bf16.gmra.mxu0 %v688
        %v914 = vpop.f32.mrf.mxu0
        %v915 = vadd.f32 %v710, %v914
        %v916 = vpop.f32.mrf.mxu0
        %v917 = vpop.f32.mrf.mxu0
        %v918 = vadd.f32 %v710, %v917
        %v919 = vpop.f32.mrf.mxu0
        %920 = vdwg.mxu0
        %v921 = vmax.f32 %v795, 0.0
        %v922 = vmax.f32 %v798, 0.0
        %v923 = vmax.f32 %v803, 0.0
        %v924 = vmax.f32 %v806, 0.0
        %v925 = vmax.f32 %v811, 0.0
        %v926 = vmax.f32 %v814, 0.0
        %v927 = vmax.f32 %v819, 0.0
        %v928 = vmax.f32 %v822, 0.0
        %v929 = vmax.f32 %v827, 0.0
        %v930 = vmax.f32 %v830, 0.0
        %v931 = vmax.f32 %v835, 0.0
        %v932 = vmax.f32 %v838, 0.0
        %v933 = vmax.f32 %v843, 0.0
        %v934 = vmax.f32 %v846, 0.0
        %v935 = vmax.f32 %v851, 0.0
        %v936 = vmax.f32 %v854, 0.0
        %v937 = vmax.f32 %v859, 0.0
        %v938 = vmax.f32 %v862, 0.0
        %v939 = vmax.f32 %v867, 0.0
        %v940 = vmax.f32 %v870, 0.0
        %v941 = vmax.f32 %v875, 0.0
        %v942 = vmax.f32 %v878, 0.0
        %v943 = vmax.f32 %v883, 0.0
        %v944 = vmax.f32 %v886, 0.0
        %v945 = vmax.f32 %v891, 0.0
        %v946 = vmax.f32 %v894, 0.0
        %v947 = vmax.f32 %v899, 0.0
        %v948 = vmax.f32 %v902, 0.0
        %v949 = vmax.f32 %v907, 0.0
        %v950 = vmax.f32 %v910, 0.0
        %v951 = vmax.f32 %v915, 0.0
        %v952 = vmax.f32 %v918, 0.0
        %v953 = vpack.c.bf16 %v922, %v921
        %v954 = vpack.c.bf16 %v924, %v923
        %v955 = vpack.c.bf16 %v926, %v925
        %v956 = vpack.c.bf16 %v928, %v927
        %v957 = vpack.c.bf16 %v930, %v929
        %v958 = vpack.c.bf16 %v932, %v931
        %v959 = vpack.c.bf16 %v934, %v933
        %v960 = vpack.c.bf16 %v936, %v935
        %v961 = vpack.c.bf16 %v938, %v937
        %v962 = vpack.c.bf16 %v940, %v939
        %v963 = vpack.c.bf16 %v942, %v941
        %v964 = vpack.c.bf16 %v944, %v943
        %v965 = vpack.c.bf16 %v946, %v945
        %v966 = vpack.c.bf16 %v948, %v947
        %v967 = vpack.c.bf16 %v950, %v949
        %v968 = vpack.c.bf16 %v952, %v951
        %v969 = vld [vmem:[%s3] sm:$0xf]
        %v970 = vld [vmem:[%s3 + $0x4] sm:$0xf]
        %v971 = vld [vmem:[%s3 + $0x8] sm:$0xf]
        %v972 = vld [vmem:[%s3 + $0xc] sm:$0xf]
        %v973 = vld [vmem:[%s3 + $0x10] sm:$0xf]
        %v974 = vld [vmem:[%s3 + $0x14] sm:$0xf]
        %v975 = vld [vmem:[%s3 + $0x18] sm:$0xf]
        %v976 = vld [vmem:[%s3 + $0x1c] sm:$0xf]
        %v977 = vld [vmem:[%s3 + $0x20] sm:$0xf]
        %v978 = vld [vmem:[%s3 + $0x24] sm:$0xf]
        %v979 = vld [vmem:[%s3 + $0x28] sm:$0xf]
        %v980 = vld [vmem:[%s3 + $0x2c] sm:$0xf]
        %v981 = vld [vmem:[%s3 + $0x30] sm:$0xf]
        %v982 = vld [vmem:[%s3 + $0x34] sm:$0xf]
        %v983 = vld [vmem:[%s3 + $0x38] sm:$0xf]
        %v984 = vld [vmem:[%s3 + $0x3c] sm:$0xf]
        %v985 = vld [vmem:[%s6] sm:$0x1]
        %v987 = vlaneseq
        %v988 = vshrl.u32 %v987, 7
        %v989 = vsub.s32 0, %v988
        %v990 = vrot.slane %v985, %v989
        %v1008 = vunpack.c.l.b16 %v969
        %v1009 = vunpack.c.l.b16 %v970
        %v1010 = vunpack.c.l.b16 %v971
        %v1011 = vunpack.c.l.b16 %v972
        %v1012 = vunpack.c.l.b16 %v973
        %v1013 = vunpack.c.l.b16 %v974
        %v1014 = vunpack.c.l.b16 %v975
        %v1015 = vunpack.c.l.b16 %v976
        %v1016 = vunpack.c.l.b16 %v977
        %v1017 = vunpack.c.l.b16 %v978
        %v1018 = vunpack.c.l.b16 %v979
        %v1019 = vunpack.c.l.b16 %v980
        %v1020 = vunpack.c.l.b16 %v981
        %v1021 = vunpack.c.l.b16 %v982
        %v1022 = vunpack.c.l.b16 %v983
        %v1023 = vunpack.c.l.b16 %v984
        %v1024 = vpack.c.b16 %v1009, %v1008
        %v1025 = vpack.c.b16 %v1011, %v1010
        %v1026 = vpack.c.b16 %v1013, %v1012
        %v1027 = vpack.c.b16 %v1015, %v1014
        %v1028 = vpack.c.b16 %v1017, %v1016
        %v1029 = vpack.c.b16 %v1019, %v1018
        %v1030 = vpack.c.b16 %v1021, %v1020
        %v1031 = vpack.c.b16 %v1023, %v1022
        %1040 = vmatprep.subr.bf16.mxu0 0
        %1041 = vmatpush1.bf16.msra.mxu0 %v1031
        %1042 = vmatprep.subr.bf16.mxu0 0
        %1043 = vmatpush1.bf16.msra.mxu0 %v1030
        %1044 = vmatprep.subr.bf16.mxu0 0
        %1045 = vmatpush1.bf16.msra.mxu0 %v1029
        %1046 = vmatprep.subr.bf16.mxu0 0
        %1047 = vmatpush1.bf16.msra.mxu0 %v1028
        %1048 = vmatprep.subr.bf16.mxu0 0
        %1049 = vmatpush1.bf16.msra.mxu0 %v1027
        %1050 = vmatprep.subr.bf16.mxu0 0
        %1051 = vmatpush1.bf16.msra.mxu0 %v1026
        %1052 = vmatprep.subr.bf16.mxu0 0
        %1053 = vmatpush1.bf16.msra.mxu0 %v1025
        %1054 = vmatprep.subr.bf16.mxu0 0
        %1055 = vmatpush1.bf16.msra.mxu0 %v1024
        %1056 = vmatprep.subr.bf16.mxu0 0
        %1057 = vmatpush2.bf16.msra.mxu0 0
        %1058 = vmatprep.subr.bf16.mxu0 0
        %1059 = vmatpush2.bf16.msra.mxu0 0
        %1060 = vmatprep.subr.bf16.mxu0 0
        %1061 = vmatpush2.bf16.msra.mxu0 0
        %1062 = vmatprep.subr.bf16.mxu0 0
        %1063 = vmatpush2.bf16.msra.mxu0 0
        %1064 = vmatprep.subr.bf16.mxu0 0
        %1065 = vmatpush2.bf16.msra.mxu0 0
        %1066 = vmatprep.subr.bf16.mxu0 0
        %1067 = vmatpush2.bf16.msra.mxu0 0
        %1068 = vmatprep.subr.bf16.mxu0 0
        %1069 = vmatpush2.bf16.msra.mxu0 0
        %1070 = vmatprep.subr.bf16.mxu0 0
        %1071 = vmatpush2.bf16.msra.mxu0 0
        %1072 = vmatprep.mubr.bf16.mxu0 0
        %1073 = vmatmul.mubr.bf16.gmra.mxu0 %v953
        %v1074 = vpop.f32.mrf.mxu0
        %v1075 = vadd.f32 %v990, %v1074
        %v1076 = vpop.f32.mrf.mxu0
        %v1077 = vpop.f32.mrf.mxu0
        %v1078 = vadd.f32 %v990, %v1077
        %v1079 = vpop.f32.mrf.mxu0
        %1080 = vmatprep.mubr.bf16.mxu0 0
        %1081 = vmatmul.mubr.bf16.gmra.mxu0 %v954
        %v1082 = vpop.f32.mrf.mxu0
        %v1083 = vadd.f32 %v990, %v1082
        %v1084 = vpop.f32.mrf.mxu0
        %v1085 = vpop.f32.mrf.mxu0
        %v1086 = vadd.f32 %v990, %v1085
        %v1087 = vpop.f32.mrf.mxu0
        %1088 = vmatprep.mubr.bf16.mxu0 0
        %1089 = vmatmul.mubr.bf16.gmra.mxu0 %v955
        %v1090 = vpop.f32.mrf.mxu0
        %v1091 = vadd.f32 %v990, %v1090
        %v1092 = vpop.f32.mrf.mxu0
        %v1093 = vpop.f32.mrf.mxu0
        %v1094 = vadd.f32 %v990, %v1093
        %v1095 = vpop.f32.mrf.mxu0
        %1096 = vmatprep.mubr.bf16.mxu0 0
        %1097 = vmatmul.mubr.bf16.gmra.mxu0 %v956
        %v1098 = vpop.f32.mrf.mxu0
        %v1099 = vadd.f32 %v990, %v1098
        %v1100 = vpop.f32.mrf.mxu0
        %v1101 = vpop.f32.mrf.mxu0
        %v1102 = vadd.f32 %v990, %v1101
        %v1103 = vpop.f32.mrf.mxu0
        %1104 = vmatprep.mubr.bf16.mxu0 0
        %1105 = vmatmul.mubr.bf16.gmra.mxu0 %v957
        %v1106 = vpop.f32.mrf.mxu0
        %v1107 = vadd.f32 %v990, %v1106
        %v1108 = vpop.f32.mrf.mxu0
        %v1109 = vpop.f32.mrf.mxu0
        %v1110 = vadd.f32 %v990, %v1109
        %v1111 = vpop.f32.mrf.mxu0
        %1112 = vmatprep.mubr.bf16.mxu0 0
        %1113 = vmatmul.mubr.bf16.gmra.mxu0 %v958
        %v1114 = vpop.f32.mrf.mxu0
        %v1115 = vadd.f32 %v990, %v1114
        %v1116 = vpop.f32.mrf.mxu0
        %v1117 = vpop.f32.mrf.mxu0
        %v1118 = vadd.f32 %v990, %v1117
        %v1119 = vpop.f32.mrf.mxu0
        %1120 = vmatprep.mubr.bf16.mxu0 0
        %1121 = vmatmul.mubr.bf16.gmra.mxu0 %v959
        %v1122 = vpop.f32.mrf.mxu0
        %v1123 = vadd.f32 %v990, %v1122
        %v1124 = vpop.f32.mrf.mxu0
        %v1125 = vpop.f32.mrf.mxu0
        %v1126 = vadd.f32 %v990, %v1125
        %v1127 = vpop.f32.mrf.mxu0
        %1128 = vmatprep.mubr.bf16.mxu0 0
        %1129 = vmatmul.mubr.bf16.gmra.mxu0 %v960
        %v1130 = vpop.f32.mrf.mxu0
        %v1131 = vadd.f32 %v990, %v1130
        %v1132 = vpop.f32.mrf.mxu0
        %v1133 = vpop.f32.mrf.mxu0
        %v1134 = vadd.f32 %v990, %v1133
        %v1135 = vpop.f32.mrf.mxu0
        %1136 = vmatprep.mubr.bf16.mxu0 0
        %1137 = vmatmul.mubr.bf16.gmra.mxu0 %v961
        %v1138 = vpop.f32.mrf.mxu0
        %v1139 = vadd.f32 %v990, %v1138
        %v1140 = vpop.f32.mrf.mxu0
        %v1141 = vpop.f32.mrf.mxu0
        %v1142 = vadd.f32 %v990, %v1141
        %v1143 = vpop.f32.mrf.mxu0
        %1144 = vmatprep.mubr.bf16.mxu0 0
        %1145 = vmatmul.mubr.bf16.gmra.mxu0 %v962
        %v1146 = vpop.f32.mrf.mxu0
        %v1147 = vadd.f32 %v990, %v1146
        %v1148 = vpop.f32.mrf.mxu0
        %v1149 = vpop.f32.mrf.mxu0
        %v1150 = vadd.f32 %v990, %v1149
        %v1151 = vpop.f32.mrf.mxu0
        %1152 = vmatprep.mubr.bf16.mxu0 0
        %1153 = vmatmul.mubr.bf16.gmra.mxu0 %v963
        %v1154 = vpop.f32.mrf.mxu0
        %v1155 = vadd.f32 %v990, %v1154
        %v1156 = vpop.f32.mrf.mxu0
        %v1157 = vpop.f32.mrf.mxu0
        %v1158 = vadd.f32 %v990, %v1157
        %v1159 = vpop.f32.mrf.mxu0
        %1160 = vmatprep.mubr.bf16.mxu0 0
        %1161 = vmatmul.mubr.bf16.gmra.mxu0 %v964
        %v1162 = vpop.f32.mrf.mxu0
        %v1163 = vadd.f32 %v990, %v1162
        %v1164 = vpop.f32.mrf.mxu0
        %v1165 = vpop.f32.mrf.mxu0
        %v1166 = vadd.f32 %v990, %v1165
        %v1167 = vpop.f32.mrf.mxu0
        %1168 = vmatprep.mubr.bf16.mxu0 0
        %1169 = vmatmul.mubr.bf16.gmra.mxu0 %v965
        %v1170 = vpop.f32.mrf.mxu0
        %v1171 = vadd.f32 %v990, %v1170
        %v1172 = vpop.f32.mrf.mxu0
        %v1173 = vpop.f32.mrf.mxu0
        %v1174 = vadd.f32 %v990, %v1173
        %v1175 = vpop.f32.mrf.mxu0
        %1176 = vmatprep.mubr.bf16.mxu0 0
        %1177 = vmatmul.mubr.bf16.gmra.mxu0 %v966
        %v1178 = vpop.f32.mrf.mxu0
        %v1179 = vadd.f32 %v990, %v1178
        %v1180 = vpop.f32.mrf.mxu0
        %v1181 = vpop.f32.mrf.mxu0
        %v1182 = vadd.f32 %v990, %v1181
        %v1183 = vpop.f32.mrf.mxu0
        %1184 = vmatprep.mubr.bf16.mxu0 0
        %1185 = vmatmul.mubr.bf16.gmra.mxu0 %v967
        %v1186 = vpop.f32.mrf.mxu0
        %v1187 = vadd.f32 %v990, %v1186
        %v1188 = vpop.f32.mrf.mxu0
        %v1189 = vpop.f32.mrf.mxu0
        %v1190 = vadd.f32 %v990, %v1189
        %v1191 = vpop.f32.mrf.mxu0
        %1192 = vmatprep.mubr.bf16.mxu0 0
        %1193 = vmatmul.mubr.bf16.gmra.mxu0 %v968
        %v1194 = vpop.f32.mrf.mxu0
        %v1195 = vadd.f32 %v990, %v1194
        %v1196 = vpop.f32.mrf.mxu0
        %v1197 = vpop.f32.mrf.mxu0
        %v1198 = vadd.f32 %v990, %v1197
        %v1199 = vpop.f32.mrf.mxu0
        %1200 = vdwg.mxu0
        %v1201 = vunpack.c.l.bf16 %v281
        %v1202 = vunpack.c.l.bf16 %v282
        %v1203 = vunpack.c.l.bf16 %v283
        %v1204 = vunpack.c.l.bf16 %v284
        %v1205 = vunpack.c.l.bf16 %v285
        %v1206 = vunpack.c.l.bf16 %v286
        %v1207 = vunpack.c.l.bf16 %v287
        %v1208 = vunpack.c.l.bf16 %v288
        %v1209 = vunpack.c.l.bf16 %v289
        %v1210 = vunpack.c.l.bf16 %v290
        %v1211 = vunpack.c.l.bf16 %v291
        %v1212 = vunpack.c.l.bf16 %v292
        %v1213 = vunpack.c.l.bf16 %v293
        %v1214 = vunpack.c.l.bf16 %v294
        %v1215 = vunpack.c.l.bf16 %v295
        %v1216 = vunpack.c.l.bf16 %v296
        %v1217 = vunpack.c.l.bf16 %v297
        %v1218 = vunpack.c.l.bf16 %v298
        %v1219 = vunpack.c.l.bf16 %v299
        %v1220 = vunpack.c.l.bf16 %v300
        %v1221 = vunpack.c.l.bf16 %v301
        %v1222 = vunpack.c.l.bf16 %v302
        %v1223 = vunpack.c.l.bf16 %v303
        %v1224 = vunpack.c.l.bf16 %v304
        %v1225 = vunpack.c.l.bf16 %v305
        %v1226 = vunpack.c.l.bf16 %v306
        %v1227 = vunpack.c.l.bf16 %v307
        %v1228 = vunpack.c.l.bf16 %v308
        %v1229 = vunpack.c.l.bf16 %v309
        %v1230 = vunpack.c.l.bf16 %v310
        %v1231 = vunpack.c.l.bf16 %v311
        %v1232 = vunpack.c.l.bf16 %v312
        %v1233 = vadd.f32 %v1075, %v1201
        %v1234 = vadd.f32 %v1078, %v1202
        %v1235 = vadd.f32 %v1083, %v1203
        %v1236 = vadd.f32 %v1086, %v1204
        %v1237 = vadd.f32 %v1091, %v1205
        %v1238 = vadd.f32 %v1094, %v1206
        %v1239 = vadd.f32 %v1099, %v1207
        %v1240 = vadd.f32 %v1102, %v1208
        %v1241 = vadd.f32 %v1107, %v1209
        %v1242 = vadd.f32 %v1110, %v1210
        %v1243 = vadd.f32 %v1115, %v1211
        %v1244 = vadd.f32 %v1118, %v1212
        %v1245 = vadd.f32 %v1123, %v1213
        %v1246 = vadd.f32 %v1126, %v1214
        %v1247 = vadd.f32 %v1131, %v1215
        %v1248 = vadd.f32 %v1134, %v1216
        %v1249 = vadd.f32 %v1139, %v1217
        %v1250 = vadd.f32 %v1142, %v1218
        %v1251 = vadd.f32 %v1147, %v1219
        %v1252 = vadd.f32 %v1150, %v1220
        %v1253 = vadd.f32 %v1155, %v1221
        %v1254 = vadd.f32 %v1158, %v1222
        %v1255 = vadd.f32 %v1163, %v1223
        %v1256 = vadd.f32 %v1166, %v1224
        %v1257 = vadd.f32 %v1171, %v1225
        %v1258 = vadd.f32 %v1174, %v1226
        %v1259 = vadd.f32 %v1179, %v1227
        %v1260 = vadd.f32 %v1182, %v1228
        %v1261 = vadd.f32 %v1187, %v1229
        %v1262 = vadd.f32 %v1190, %v1230
        %v1263 = vadd.f32 %v1195, %v1231
        %v1264 = vadd.f32 %v1198, %v1232
        %v1265 = vmax.f32 %v1233, 0.0
        %v1266 = vmax.f32 %v1234, 0.0
        %v1267 = vmax.f32 %v1235, 0.0
        %v1268 = vmax.f32 %v1236, 0.0
        %v1269 = vmax.f32 %v1237, 0.0
        %v1270 = vmax.f32 %v1238, 0.0
        %v1271 = vmax.f32 %v1239, 0.0
        %v1272 = vmax.f32 %v1240, 0.0
        %v1273 = vmax.f32 %v1241, 0.0
        %v1274 = vmax.f32 %v1242, 0.0
        %v1275 = vmax.f32 %v1243, 0.0
        %v1276 = vmax.f32 %v1244, 0.0
        %v1277 = vmax.f32 %v1245, 0.0
        %v1278 = vmax.f32 %v1246, 0.0
        %v1279 = vmax.f32 %v1247, 0.0
        %v1280 = vmax.f32 %v1248, 0.0
        %v1281 = vmax.f32 %v1249, 0.0
        %v1282 = vmax.f32 %v1250, 0.0
        %v1283 = vmax.f32 %v1251, 0.0
        %v1284 = vmax.f32 %v1252, 0.0
        %v1285 = vmax.f32 %v1253, 0.0
        %v1286 = vmax.f32 %v1254, 0.0
        %v1287 = vmax.f32 %v1255, 0.0
        %v1288 = vmax.f32 %v1256, 0.0
        %v1289 = vmax.f32 %v1257, 0.0
        %v1290 = vmax.f32 %v1258, 0.0
        %v1291 = vmax.f32 %v1259, 0.0
        %v1292 = vmax.f32 %v1260, 0.0
        %v1293 = vmax.f32 %v1261, 0.0
        %v1294 = vmax.f32 %v1262, 0.0
        %v1295 = vmax.f32 %v1263, 0.0
        %v1296 = vmax.f32 %v1264, 0.0
        %v1297 = vpack.c.bf16 %v1266, %v1265
        %v1298 = vpack.c.bf16 %v1268, %v1267
        %v1299 = vpack.c.bf16 %v1270, %v1269
        %v1300 = vpack.c.bf16 %v1272, %v1271
        %v1301 = vpack.c.bf16 %v1274, %v1273
        %v1302 = vpack.c.bf16 %v1276, %v1275
        %v1303 = vpack.c.bf16 %v1278, %v1277
        %v1304 = vpack.c.bf16 %v1280, %v1279
        %v1305 = vpack.c.bf16 %v1282, %v1281
        %v1306 = vpack.c.bf16 %v1284, %v1283
        %v1307 = vpack.c.bf16 %v1286, %v1285
        %v1308 = vpack.c.bf16 %v1288, %v1287
        %v1309 = vpack.c.bf16 %v1290, %v1289
        %v1310 = vpack.c.bf16 %v1292, %v1291
        %v1311 = vpack.c.bf16 %v1294, %v1293
        %v1312 = vpack.c.bf16 %v1296, %v1295
        %v1329 = vunpack.c.l.b16 %v1297
        %v1330 = vunpack.c.h.b16 %v1297
        %v1331 = vunpack.c.l.b16 %v1298
        %v1332 = vunpack.c.h.b16 %v1298
        %v1333 = vunpack.c.l.b16 %v1299
        %v1334 = vunpack.c.h.b16 %v1299
        %v1335 = vunpack.c.l.b16 %v1300
        %v1336 = vunpack.c.h.b16 %v1300
        %v1337 = vunpack.c.l.b16 %v1301
        %v1338 = vunpack.c.h.b16 %v1301
        %v1339 = vunpack.c.l.b16 %v1302
        %v1340 = vunpack.c.h.b16 %v1302
        %v1341 = vunpack.c.l.b16 %v1303
        %v1342 = vunpack.c.h.b16 %v1303
        %v1343 = vunpack.c.l.b16 %v1304
        %v1344 = vunpack.c.h.b16 %v1304
        %v1345 = vunpack.c.l.b16 %v1305
        %v1346 = vunpack.c.h.b16 %v1305
        %v1347 = vunpack.c.l.b16 %v1306
        %v1348 = vunpack.c.h.b16 %v1306
        %v1349 = vunpack.c.l.b16 %v1307
        %v1350 = vunpack.c.h.b16 %v1307
        %v1351 = vunpack.c.l.b16 %v1308
        %v1352 = vunpack.c.h.b16 %v1308
        %v1353 = vunpack.c.l.b16 %v1309
        %v1354 = vunpack.c.h.b16 %v1309
        %v1355 = vunpack.c.l.b16 %v1310
        %v1356 = vunpack.c.h.b16 %v1310
        %v1357 = vunpack.c.l.b16 %v1311
        %v1358 = vunpack.c.h.b16 %v1311
        %v1359 = vunpack.c.l.b16 %v1312
        %v1360 = vunpack.c.h.b16 %v1312
        %v1361 = vpack.c.b16 %v1329, %v1329
        %v1362 = vpack.c.b16 %v1330, %v1330
        %v1363 = vpack.c.b16 %v1331, %v1331
        %v1364 = vpack.c.b16 %v1332, %v1332
        %v1365 = vpack.c.b16 %v1333, %v1333
        %v1366 = vpack.c.b16 %v1334, %v1334
        %v1367 = vpack.c.b16 %v1335, %v1335
        %v1368 = vpack.c.b16 %v1336, %v1336
        %v1369 = vpack.c.b16 %v1337, %v1337
        %v1370 = vpack.c.b16 %v1338, %v1338
        %v1371 = vpack.c.b16 %v1339, %v1339
        %v1372 = vpack.c.b16 %v1340, %v1340
        %v1373 = vpack.c.b16 %v1341, %v1341
        %v1374 = vpack.c.b16 %v1342, %v1342
        %v1375 = vpack.c.b16 %v1343, %v1343
        %v1376 = vpack.c.b16 %v1344, %v1344
        %v1377 = vpack.c.b16 %v1345, %v1345
        %v1378 = vpack.c.b16 %v1346, %v1346
        %v1379 = vpack.c.b16 %v1347, %v1347
        %v1380 = vpack.c.b16 %v1348, %v1348
        %v1381 = vpack.c.b16 %v1349, %v1349
        %v1382 = vpack.c.b16 %v1350, %v1350
        %v1383 = vpack.c.b16 %v1351, %v1351
        %v1384 = vpack.c.b16 %v1352, %v1352
        %v1385 = vpack.c.b16 %v1353, %v1353
        %v1386 = vpack.c.b16 %v1354, %v1354
        %v1387 = vpack.c.b16 %v1355, %v1355
        %v1388 = vpack.c.b16 %v1356, %v1356
        %v1389 = vpack.c.b16 %v1357, %v1357
        %v1390 = vpack.c.b16 %v1358, %v1358
        %v1391 = vpack.c.b16 %v1359, %v1359
        %v1392 = vpack.c.b16 %v1360, %v1360
        %1425 = vst [vmem:[%s272] sm:$0xf] %v1361
        %1426 = vst [vmem:[%s272 + $0x4] sm:$0xf] %v1362
        %1427 = vst [vmem:[%s272 + $0x8] sm:$0xf] %v1363
        %1428 = vst [vmem:[%s272 + $0xc] sm:$0xf] %v1364
        %1429 = vst [vmem:[%s272 + $0x10] sm:$0xf] %v1365
        %1430 = vst [vmem:[%s272 + $0x14] sm:$0xf] %v1366
        %1431 = vst [vmem:[%s272 + $0x18] sm:$0xf] %v1367
        %1432 = vst [vmem:[%s272 + $0x1c] sm:$0xf] %v1368
        %1433 = vst [vmem:[%s272 + $0x20] sm:$0xf] %v1369
        %1434 = vst [vmem:[%s272 + $0x24] sm:$0xf] %v1370
        %1435 = vst [vmem:[%s272 + $0x28] sm:$0xf] %v1371
        %1436 = vst [vmem:[%s272 + $0x2c] sm:$0xf] %v1372
        %1437 = vst [vmem:[%s272 + $0x30] sm:$0xf] %v1373
        %1438 = vst [vmem:[%s272 + $0x34] sm:$0xf] %v1374
        %1439 = vst [vmem:[%s272 + $0x38] sm:$0xf] %v1375
        %1440 = vst [vmem:[%s272 + $0x3c] sm:$0xf] %v1376
        %1441 = vst [vmem:[%s272 + $0x40] sm:$0xf] %v1377
        %1442 = vst [vmem:[%s272 + $0x44] sm:$0xf] %v1378
        %1443 = vst [vmem:[%s272 + $0x48] sm:$0xf] %v1379
        %1444 = vst [vmem:[%s272 + $0x4c] sm:$0xf] %v1380
        %1445 = vst [vmem:[%s272 + $0x50] sm:$0xf] %v1381
        %1446 = vst [vmem:[%s272 + $0x54] sm:$0xf] %v1382
        %1447 = vst [vmem:[%s272 + $0x58] sm:$0xf] %v1383
        %1448 = vst [vmem:[%s272 + $0x5c] sm:$0xf] %v1384
        %1449 = vst [vmem:[%s272 + $0x60] sm:$0xf] %v1385
        %1450 = vst [vmem:[%s272 + $0x64] sm:$0xf] %v1386
        %1451 = vst [vmem:[%s272 + $0x68] sm:$0xf] %v1387
        %1452 = vst [vmem:[%s272 + $0x6c] sm:$0xf] %v1388
        %1453 = vst [vmem:[%s272 + $0x70] sm:$0xf] %v1389
        %1454 = vst [vmem:[%s272 + $0x74] sm:$0xf] %v1390
        %1455 = vst [vmem:[%s272 + $0x78] sm:$0xf] %v1391
        %1456 = vst [vmem:[%s272 + $0x7c] sm:$0xf] %v1392
        %s1457 = sand.u32 %s181, 1
        %s1458 = scalar_lea.sflag [#allocation3], %s1457
        %s1459 = sand.u32 %s181, 1
        %s1460 = smul.addr %s1459, 128
        %s1461 = scalar_lea.vmem [#allocation2], %s1460
        // Predicated region
        $region49: #{bottleneck1x1.1} parent=47 // pred_check
          %p1462 = pneg %p191
        $region50: #{bottleneck1x1.1} parent=47 // pred_check_branch
          %1464 = sbr.rel (%p1462) target = $region52
        $region51: #{bottleneck1x1.1} parent=47 // pred_region
          %s1465 = smul.u32 32, %s21
          %s1467 = ssub.s32 2048, 2048
          %1468 = vsyncadd %s1458, %s1467
          %s1469 = smul.addr %s1465, 64
          %s1470 = scalar_lea.hbm %s7, %s1469
          %s1471 = sshll.u32 %s1461, 4
          %s1472 = int_to_ptr.vmem [resolvable:$true] %s1471
          %1477 = dma.vmem_to_hbm [thread:$0]  %s1472, 2048, %s1470, %s1458, 64, 64, 4
        $region52: #{bottleneck1x1.1} parent=47 // pred_fallthru
          _
      $region48: #{bottleneck1x1.1} parent=5 // pred_fallthru
        _
      %p1478 = scmp.le.s32.totalorder 2, %s16
      // Predicated region
      $region53: #{bottleneck1x1.1} parent=5 // pred_check
        %p1479 = pneg %p1478
      $region54: #{bottleneck1x1.1} parent=5 // pred_check_branch
        %1481 = sbr.rel (%p1479) target = $region56
      $region55: #{bottleneck1x1.1} parent=5 // pred_region
        %s1482 = ssub.s32 %s16, 2
        // Predicated region
        $region57: #{bottleneck1x1.1} parent=55 // pred_check
          %p1483 = pneg %p197
        $region58: #{bottleneck1x1.1} parent=55 // pred_check_branch
          %1485 = sbr.rel (%p1483) target = $region60
        $region59: #{bottleneck1x1.1} parent=55 // pred_region
          %s1486 = sand.u32 %s182, 1
          %s1487 = scalar_lea.sflag [#allocation3], %s1486
          %s1488 = sand.u32 %s182, 1
          %s1489 = smul.addr %s1488, 128
          %s1490 = scalar_lea.vmem [#allocation2], %s1489
          %1491 = dma.done %s1487, 2048
        $region60: #{bottleneck1x1.1} parent=55 // pred_fallthru
          _
      $region56: #{bottleneck1x1.1} parent=5 // pred_fallthru
        _
    $region6: #{bottleneck1x1.1} parent=1 // loop_footer
      %s20 = sadd.s32 1, %s16
    $region7: #{bottleneck1x1.1} parent=1 // loop_footer_branch
      %15 = sbr.rel target = $region3
    $region8: #{bottleneck1x1.1} parent=1 // loop_exit
      _
    %1492 = vsyncpa [#allocation3], 1
    %s1493 = scalar_lea.sflag [#allocation3], 1
    %1494 = vsyncpa %s1493, 1

</llo_original>
